<compile_context>
chip_gen: v7x
topology: tpu7x:2x2x1
jax: 0.10.0
libtpu: 0.0.40
codegen_flags: <defaults>
</compile_context>

<pallas_src>
import jax
import jax.numpy as jnp
from jax.experimental import pallas as pl
from jax.experimental.pallas import tpu as pltpu


HIDDEN = 64    # logical LSTM hidden size (from the module)
HP = 128       # padded hidden width (lane-dense)
OP = 128       # padded output width (lane-dense)


# ----------------------------------------------------------------------------
# Kernel
# ----------------------------------------------------------------------------
def lstm_kernel(state_ref, u_ref, h0_ref, c0_ref,
                wih_s_ref, wih_u_ref, whh_ref, b_ref,
                wfc_ref, bfc_ref,
                gamma_ref, h_out_ref, c_out_ref,
                xg_ref):
    T, TB, n_state = state_ref.shape
    hp = HP
    mm_dtype = whh_ref.dtype            # matmul-operand dtype (f32 or bf16)

    # ---- Input projection hoisted out of the recurrence -------------------
    # One (T*TB, K) matmul per input slab instead of 2*T tiny matmuls inside
    # the serial loop; the (1, 4*hp) bias broadcast happens exactly once.
    x_s = state_ref[...].reshape(T * TB, n_state).astype(mm_dtype)
    x_u = u_ref[...].reshape(T * TB, u_ref.shape[-1]).astype(mm_dtype)
    xg = (jnp.dot(x_s, wih_s_ref[...], preferred_element_type=jnp.float32)
          + jnp.dot(x_u, wih_u_ref[...], preferred_element_type=jnp.float32)
          + b_ref[...])                                    # (T*TB, 4*hp) f32
    xg_ref[...] = xg.reshape(T, TB, 4 * hp)

    # ---- Initial state, zero-padded to lane-dense width in-kernel ---------
    zpad = jnp.zeros((TB, hp - h0_ref.shape[-1]), jnp.float32)
    h = jnp.concatenate([h0_ref[...].astype(jnp.float32), zpad], axis=-1)
    c = jnp.concatenate([c0_ref[...].astype(jnp.float32), zpad], axis=-1)

    # ---- Recurrence: a single h @ W_hh MXU pass per step ------------------
    def step(t, carry):
        h, c = carry
        # Re-read whh / the per-step gate rows from their refs each iteration:
        # bounds live ranges (no 16-vreg weight held across the whole loop).
        gates = xg_ref[t] + jnp.dot(h.astype(mm_dtype), whh_ref[...],
                                    preferred_element_type=jnp.float32)
        # Lane-aligned 128-wide gate blocks, PyTorch order [i, f, g, o].
        i_g = jax.nn.sigmoid(gates[:, 0 * hp:1 * hp])
        f_g = jax.nn.sigmoid(gates[:, 1 * hp:2 * hp])
        g_g = jnp.tanh(gates[:, 2 * hp:3 * hp])
        o_g = jax.nn.sigmoid(gates[:, 3 * hp:4 * hp])
        c = f_g * c + i_g * g_g
        h = o_g * jnp.tanh(c)
        return h, c

    if T <= 16:
        # Tiny fixed trip count: static unroll (LLO scheduler visibility).
        carry = (h, c)
        for t in range(T):
            carry = step(t, carry)
        h, c = carry
    else:
        # Long trajectories: keep code size flat and live ranges bounded.
        h, c = jax.lax.fori_loop(0, T, step, (h, c))

    # ---- Head: ReLU -> fc3 -> tanh, lane-dense output ---------------------
    x = jnp.maximum(h, 0.0)
    out = jnp.tanh(jnp.dot(x.astype(mm_dtype), wfc_ref[...],
                           preferred_element_type=jnp.float32)
                   + bfc_ref[...])                          # (TB, OP)

    gamma_ref[...] = out.astype(gamma_ref.dtype)
    h_out_ref[...] = h.astype(h_out_ref.dtype)
    c_out_ref[...] = c.astype(c_out_ref.dtype)


# ----------------------------------------------------------------------------
# Parameter init (PyTorch-style layout) and packing (padded, kernel layout)
# ----------------------------------------------------------------------------
def init_params(key, n_state, m_control, hidden=HIDDEN):
    """PyTorch-layout LSTM + Linear params with uniform(-1/sqrt(H)) init."""
    in_dim = n_state + m_control
    bound = 1.0 / float(hidden) ** 0.5
    key, k1, k2, k3, k4, k5, k6 = jax.random.split(key, 7)
    weight_ih = jax.random.uniform(k1, (4 * hidden, in_dim), jnp.float32, -bound, bound)
    weight_hh = jax.random.uniform(k2, (4 * hidden, hidden), jnp.float32, -bound, bound)
    bias_ih = jax.random.uniform(k3, (4 * hidden,), jnp.float32, -bound, bound)
    bias_hh = jax.random.uniform(k4, (4 * hidden,), jnp.float32, -bound, bound)
    fc_w = jax.random.uniform(k5, (m_control, hidden), jnp.float32, -bound, bound)
    fc_b = jax.random.uniform(k6, (m_control,), jnp.float32, -bound, bound)
    return dict(weight_ih=weight_ih, weight_hh=weight_hh,
                bias_ih=bias_ih, bias_hh=bias_hh, fc_w=fc_w, fc_b=fc_b)


def pack_params(p, n_state, m_control, hidden=HIDDEN, hp=HP, op=OP,
                matmul_dtype=jnp.float32):
    """Zero-pad to lane-dense (128-wide) layout; split W_ih along K (state|u).

    matmul_dtype=jnp.bfloat16 enables the v6e/v7x MXU fast path (biases and
    all gate/activation math stay f32).
    """
    H = hidden
    Wih, Whh = p["weight_ih"], p["weight_hh"]
    bih, bhh = p["bias_ih"], p["bias_hh"]

    wih_s_blocks, wih_u_blocks, whh_blocks, b_blocks = [], [], [], []
    for k in range(4):                                   # gate order i, f, g, o
        Wk = Wih[k * H:(k + 1) * H, :]                   # (H, in_dim)
        Hk = Whh[k * H:(k + 1) * H, :]                   # (H, H)
        bk = bih[k * H:(k + 1) * H] + bhh[k * H:(k + 1) * H]
        wih_s_blocks.append(jnp.pad(Wk[:, :n_state].T, ((0, 0), (0, hp - H))))
        wih_u_blocks.append(jnp.pad(Wk[:, n_state:].T, ((0, 0), (0, hp - H))))
        whh_blocks.append(jnp.pad(Hk.T, ((0, hp - H), (0, hp - H))))
        b_blocks.append(jnp.pad(bk, (0, hp - H)))

    wih_s = jnp.concatenate(wih_s_blocks, axis=1).astype(matmul_dtype)  # (n_state,   4*hp)
    wih_u = jnp.concatenate(wih_u_blocks, axis=1).astype(matmul_dtype)  # (m_control, 4*hp)
    whh = jnp.concatenate(whh_blocks, axis=1).astype(matmul_dtype)      # (hp,        4*hp)
    b = jnp.concatenate(b_blocks)[None, :].astype(jnp.float32)          # (1,         4*hp)
    wfc = jnp.pad(p["fc_w"].T, ((0, hp - H), (0, op - m_control))
                  ).astype(matmul_dtype)                                # (hp, op)
    bfc = jnp.pad(p["fc_b"], (0, op - m_control))[None, :].astype(jnp.float32)  # (1, op)
    return wih_s, wih_u, whh, b, wfc, bfc


# ----------------------------------------------------------------------------
# Wrapper
# ----------------------------------------------------------------------------
def gamma_lstm_forward(state, u, packed, h0=None, c0=None,
                       hidden=HIDDEN, max_batch_tile=128,
                       split_for_megacore=True):
    """
    args:
        state : (bs, traj_len, n_state) f32
        u     : (bs, traj_len, m_control) f32
        packed: output of pack_params
        h0, c0: optional (bs, hidden) carried LSTM state (zeros if None)
    returns:
        gamma (bs, m_control), h_n (bs, hidden), c_n (bs, hidden)
    """
    bs, T, n_state = state.shape
    m_control = u.shape[-1]
    wih_s, wih_u, whh, b, wfc, bfc = packed

    # Time-major layout so one batch tile is a contiguous (T, TB, feat) block
    # and the hoisted input projection is a single (T*TB, feat) matmul.
    state_tm = jnp.transpose(state, (1, 0, 2))   # (T, bs, n_state)
    u_tm = jnp.transpose(u, (1, 0, 2))           # (T, bs, m_control)

    # Unpadded carried state (zeros by default, padded in-kernel).
    if h0 is None:
        h0 = jnp.zeros((bs, hidden), jnp.float32)
    if c0 is None:
        c0 = jnp.zeros((bs, hidden), jnp.float32)
    h0 = h0.astype(jnp.float32)
    c0 = c0.astype(jnp.float32)

    # Batch tile: ensure >= 2 grid steps on the "parallel" axis when the batch
    # is large enough (v7x has 2 TensorCores per chip).
    if split_for_megacore and bs >= 16:
        half = -(-bs // 2)
        half = -(-half // 8) * 8                 # sublane-aligned
        TB = min(max_batch_tile, half)
    else:
        TB = min(bs, max_batch_tile)
    grid = (pl.cdiv(bs, TB),)

    const2 = lambda i: (0, 0)
    in_specs = [
        pl.BlockSpec((T, TB, n_state), lambda i: (0, i, 0)),
        pl.BlockSpec((T, TB, m_control), lambda i: (0, i, 0)),
        pl.BlockSpec((TB, hidden), lambda i: (i, 0)),
        pl.BlockSpec((TB, hidden), lambda i: (i, 0)),
        pl.BlockSpec(wih_s.shape, const2),   # weights: constant index_map ->
        pl.BlockSpec(wih_u.shape, const2),   # stay resident across batch tiles
        pl.BlockSpec(whh.shape, const2),
        pl.BlockSpec(b.shape, const2),
        pl.BlockSpec(wfc.shape, const2),
        pl.BlockSpec(bfc.shape, const2),
    ]
    out_specs = (
        pl.BlockSpec((TB, OP), lambda i: (i, 0)),
        pl.BlockSpec((TB, HP), lambda i: (i, 0)),
        pl.BlockSpec((TB, HP), lambda i: (i, 0)),
    )
    out_shape = (
        jax.ShapeDtypeStruct((bs, OP), jnp.float32),
        jax.ShapeDtypeStruct((bs, HP), jnp.float32),
        jax.ShapeDtypeStruct((bs, HP), jnp.float32),
    )
    # Precomputed input-projection gates live in VMEM scratch.
    scratch_shapes = [pltpu.VMEM((T, TB, 4 * HP), jnp.float32)]

    gamma_p, h_p, c_p = pl.pallas_call(
        lstm_kernel,
        out_shape=out_shape,
        grid=grid,
        in_specs=in_specs,
        out_specs=out_specs,
        scratch_shapes=scratch_shapes,
        compiler_params=pltpu.CompilerParams(
            dimension_semantics=("parallel",)),
    )(state_tm, u_tm, h0, c0, wih_s, wih_u, whh, b, wfc, bfc)

    return gamma_p[:, :m_control], h_p[:, :hidden], c_p[:, :hidden]


# ----------------------------------------------------------------------------
# Pure-JAX reference matching PyTorch LSTM semantics
# ----------------------------------------------------------------------------
def reference_forward(state, u, p, h0=None, c0=None, hidden=HIDDEN):
    bs, T, _ = state.shape
    Wih, Whh = p["weight_ih"], p["weight_hh"]
    bih, bhh = p["bias_ih"], p["bias_hh"]
    H = hidden
    x = jnp.concatenate([state, u], axis=-1)
    h = jnp.zeros((bs, H), jnp.float32) if h0 is None else h0
    c = jnp.zeros((bs, H), jnp.float32) if c0 is None else c0
    for t in range(T):
        xt = x[:, t, :]
        gates = xt @ Wih.T + bih + h @ Whh.T + bhh
        i = jax.nn.sigmoid(gates[:, 0 * H:1 * H])
        f = jax.nn.sigmoid(gates[:, 1 * H:2 * H])
        g = jnp.tanh(gates[:, 2 * H:3 * H])
        o = jax.nn.sigmoid(gates[:, 3 * H:4 * H])
        c = f * c + i * g
        h = o * jnp.tanh(c)
    gamma = jnp.tanh(jax.nn.relu(h) @ p["fc_w"].T + p["fc_b"])
    return gamma, h, c


# ----------------------------------------------------------------------------
if __name__ == "__main__":
    n_state, m_control, traj_len, bs = 4, 2, 8, 2

    key = jax.random.PRNGKey(0)
    k_state, k_u, k_params = jax.random.split(key, 3)

    state = jax.random.normal(k_state, (bs, traj_len, n_state), jnp.float32)
    u = jax.random.normal(k_u, (bs, traj_len, m_control), jnp.float32)

    params = init_params(k_params, n_state, m_control)
    g_ref, h_ref, c_ref = reference_forward(state, u, params)

    # --- f32 matmul path (exact-tolerance check) ---
    packed_f32 = pack_params(params, n_state, m_control)
    gamma, h_n, c_n = gamma_lstm_forward(state, u, packed_f32)
    gamma = jax.block_until_ready(gamma)
    assert gamma.shape == (bs, m_control)
    assert jnp.allclose(gamma, g_ref, atol=1e-5, rtol=1e-5)
    assert jnp.allclose(h_n, h_ref, atol=1e-5, rtol=1e-5)
    assert jnp.allclose(c_n, c_ref, atol=1e-5, rtol=1e-5)

    # --- bf16 matmul-operand path (v6e/v7x MXU fast path, looser tolerance) ---
    packed_bf16 = pack_params(params, n_state, m_control,
                              matmul_dtype=jnp.bfloat16)
    gamma_bf, h_bf, c_bf = gamma_lstm_forward(state, u, packed_bf16)
    gamma_bf = jax.block_until_ready(gamma_bf)
    assert jnp.allclose(gamma_bf, g_ref, atol=1e-1, rtol=0)
    assert jnp.allclose(h_bf, h_ref, atol=1e-1, rtol=0)
    assert jnp.allclose(c_bf, c_ref, atol=1e-1, rtol=0)

    print("KERNEL_OK")
</pallas_src>

<mosaic_0001>
module attributes {stable_mosaic.version = 11 : i64} {
  func.func @lstm_kernel(%arg0: i32, %arg1: memref<8x2x4xf32, #tpu.memory_space<vmem>>, %arg2: memref<8x2x2xf32, #tpu.memory_space<vmem>>, %arg3: memref<2x64xf32, #tpu.memory_space<vmem>>, %arg4: memref<2x64xf32, #tpu.memory_space<vmem>>, %arg5: memref<4x512xf32, #tpu.memory_space<vmem>>, %arg6: memref<2x512xf32, #tpu.memory_space<vmem>>, %arg7: memref<128x512xf32, #tpu.memory_space<vmem>>, %arg8: memref<1x512xf32, #tpu.memory_space<vmem>>, %arg9: memref<128x128xf32, #tpu.memory_space<vmem>>, %arg10: memref<1x128xf32, #tpu.memory_space<vmem>>, %arg11: memref<2x128xf32, #tpu.memory_space<vmem>>, %arg12: memref<2x128xf32, #tpu.memory_space<vmem>>, %arg13: memref<2x128xf32, #tpu.memory_space<vmem>>, %arg14: memref<8x2x512xf32, #tpu.memory_space<vmem>>) attributes {dimension_semantics = [#tpu.dimension_semantics<parallel>], iteration_bounds = array<i64: 1>, scalar_prefetch = 0 : i64, scratch_operands = 1 : i64, tpu.core_type = #tpu.core_type<tc>, window_params = [{transform_indices = @transform_0, window_bounds = array<i64: 8, 2, 4>}, {transform_indices = @transform_1, window_bounds = array<i64: 8, 2, 2>}, {transform_indices = @transform_2, window_bounds = array<i64: 2, 64>}, {transform_indices = @transform_3, window_bounds = array<i64: 2, 64>}, {pipeline_mode = #tpu.pipeline_mode<synchronous>, transform_indices = @transform_4, window_bounds = array<i64: 4, 512>}, {pipeline_mode = #tpu.pipeline_mode<synchronous>, transform_indices = @transform_5, window_bounds = array<i64: 2, 512>}, {pipeline_mode = #tpu.pipeline_mode<synchronous>, transform_indices = @transform_6, window_bounds = array<i64: 128, 512>}, {pipeline_mode = #tpu.pipeline_mode<synchronous>, transform_indices = @transform_7, window_bounds = array<i64: 1, 512>}, {pipeline_mode = #tpu.pipeline_mode<synchronous>, transform_indices = @transform_8, window_bounds = array<i64: 128, 128>}, {pipeline_mode = #tpu.pipeline_mode<synchronous>, transform_indices = @transform_9, window_bounds = array<i64: 1, 128>}, {transform_indices = @transform_10, window_bounds = array<i64: 2, 128>}, {transform_indices = @transform_11, window_bounds = array<i64: 2, 128>}, {transform_indices = @transform_12, window_bounds = array<i64: 2, 128>}]} {
    %c0 = arith.constant 0 : index
    %c0_0 = arith.constant 0 : index
    %c0_1 = arith.constant 0 : index
    %0 = vector.load %arg1[%c0, %c0_0, %c0_1] : memref<8x2x4xf32, #tpu.memory_space<vmem>>, vector<8x2x4xf32>
    %1 = vector.shape_cast %0 : vector<8x2x4xf32> to vector<16x4xf32>
    %c0_2 = arith.constant 0 : index
    %c0_3 = arith.constant 0 : index
    %c0_4 = arith.constant 0 : index
    %2 = vector.load %arg2[%c0_2, %c0_3, %c0_4] : memref<8x2x2xf32, #tpu.memory_space<vmem>>, vector<8x2x2xf32>
    %3 = vector.shape_cast %2 : vector<8x2x2xf32> to vector<16x2xf32>
    %c0_5 = arith.constant 0 : index
    %c0_6 = arith.constant 0 : index
    %4 = vector.load %arg5[%c0_5, %c0_6] : memref<4x512xf32, #tpu.memory_space<vmem>>, vector<4x512xf32>
    %cst = arith.constant dense<0.000000e+00> : vector<16x512xf32>
    %5 = tpu.matmul %1, %4, %cst {dimension_numbers = #tpu.dot_dimension_numbers<[1], [0], [0], [1], [0, 0, 1, 1], [], []>} : vector<16x4xf32>, vector<4x512xf32>, vector<16x512xf32> -> vector<16x512xf32>
    %c0_7 = arith.constant 0 : index
    %c0_8 = arith.constant 0 : index
    %6 = vector.load %arg6[%c0_7, %c0_8] : memref<2x512xf32, #tpu.memory_space<vmem>>, vector<2x512xf32>
    %cst_9 = arith.constant dense<0.000000e+00> : vector<16x512xf32>
    %7 = tpu.matmul %3, %6, %cst_9 {dimension_numbers = #tpu.dot_dimension_numbers<[1], [0], [0], [1], [0, 0, 1, 1], [], []>} : vector<16x2xf32>, vector<2x512xf32>, vector<16x512xf32> -> vector<16x512xf32>
    %8 = arith.addf %5, %7 : vector<16x512xf32>
    %c0_10 = arith.constant 0 : index
    %c0_11 = arith.constant 0 : index
    %9 = vector.load %arg8[%c0_10, %c0_11] : memref<1x512xf32, #tpu.memory_space<vmem>>, vector<1x512xf32>
    %10 = vector.broadcast %9 : vector<1x512xf32> to vector<16x512xf32>
    %11 = arith.addf %8, %10 : vector<16x512xf32>
    %12 = vector.shape_cast %11 : vector<16x512xf32> to vector<8x2x512xf32>
    %c0_12 = arith.constant 0 : index
    %c0_13 = arith.constant 0 : index
    %c0_14 = arith.constant 0 : index
    %13 = vector.load %arg14[%c0_12, %c0_13, %c0_14] : memref<8x2x512xf32, #tpu.memory_space<vmem>>, vector<8x2x512xf32>
    tpu.vector_store %arg14[%c0_12, %c0_13, %c0_14], %12 {strides = array<i32>} : memref<8x2x512xf32, #tpu.memory_space<vmem>>, vector<8x2x512xf32>,
    %cst_15 = arith.constant 0.000000e+00 : f32
    %14 = vector.broadcast %cst_15 : f32 to vector<2x64xf32>
    %c0_16 = arith.constant 0 : index
    %c0_17 = arith.constant 0 : index
    %15 = vector.load %arg3[%c0_16, %c0_17] : memref<2x64xf32, #tpu.memory_space<vmem>>, vector<2x64xf32>
    %16 = tpu.concatenate %15, %14 in 1 : vector<2x64xf32>, vector<2x64xf32> -> vector<2x128xf32>
    %c0_18 = arith.constant 0 : index
    %c0_19 = arith.constant 0 : index
    %17 = vector.load %arg4[%c0_18, %c0_19] : memref<2x64xf32, #tpu.memory_space<vmem>>, vector<2x64xf32>
    %18 = tpu.concatenate %17, %14 in 1 : vector<2x64xf32>, vector<2x64xf32> -> vector<2x128xf32>
    %c0_20 = arith.constant 0 : index
    %c0_21 = arith.constant 0 : index
    %c0_22 = arith.constant 0 : index
    %19 = vector.load %arg14[%c0_20, %c0_21, %c0_22] : memref<8x2x512xf32, #tpu.memory_space<vmem>>, vector<1x2x512xf32>
    %20 = vector.shape_cast %19 : vector<1x2x512xf32> to vector<2x512xf32>
    %c0_23 = arith.constant 0 : index
    %c0_24 = arith.constant 0 : index
    %21 = vector.load %arg7[%c0_23, %c0_24] : memref<128x512xf32, #tpu.memory_space<vmem>>, vector<128x512xf32>
    %cst_25 = arith.constant dense<0.000000e+00> : vector<2x512xf32>
    %22 = tpu.matmul %16, %21, %cst_25 {dimension_numbers = #tpu.dot_dimension_numbers<[1], [0], [0], [1], [0, 0, 1, 1], [], []>} : vector<2x128xf32>, vector<128x512xf32>, vector<2x512xf32> -> vector<2x512xf32>
    %23 = arith.addf %20, %22 : vector<2x512xf32>
    %24 = vector.extract_strided_slice %23 {offsets = [0, 0], sizes = [2, 128], strides = [1, 1]} : vector<2x512xf32> to vector<2x128xf32>
    %25 = arith.negf %24 : vector<2x128xf32>
    %26 = math.exp %25 : vector<2x128xf32>
    %cst_26 = arith.constant 1.000000e+00 : f32
    %27 = vector.broadcast %cst_26 : f32 to vector<2x128xf32>
    %28 = arith.addf %27, %26 : vector<2x128xf32>
    %29 = arith.divf %27, %28 : vector<2x128xf32>
    %30 = vector.extract_strided_slice %23 {offsets = [0, 128], sizes = [2, 128], strides = [1, 1]} : vector<2x512xf32> to vector<2x128xf32>
    %31 = arith.negf %30 : vector<2x128xf32>
    %32 = math.exp %31 : vector<2x128xf32>
    %cst_27 = arith.constant 1.000000e+00 : f32
    %33 = vector.broadcast %cst_27 : f32 to vector<2x128xf32>
    %34 = arith.addf %33, %32 : vector<2x128xf32>
    %35 = arith.divf %33, %34 : vector<2x128xf32>
    %36 = vector.extract_strided_slice %23 {offsets = [0, 256], sizes = [2, 128], strides = [1, 1]} : vector<2x512xf32> to vector<2x128xf32>
    %37 = math.tanh %36 : vector<2x128xf32>
    %38 = vector.extract_strided_slice %23 {offsets = [0, 384], sizes = [2, 128], strides = [1, 1]} : vector<2x512xf32> to vector<2x128xf32>
    %39 = arith.negf %38 : vector<2x128xf32>
    %40 = math.exp %39 : vector<2x128xf32>
    %cst_28 = arith.constant 1.000000e+00 : f32
    %41 = vector.broadcast %cst_28 : f32 to vector<2x128xf32>
    %42 = arith.addf %41, %40 : vector<2x128xf32>
    %43 = arith.divf %41, %42 : vector<2x128xf32>
    %44 = arith.mulf %35, %18 : vector<2x128xf32>
    %45 = arith.mulf %29, %37 : vector<2x128xf32>
    %46 = arith.addf %44, %45 : vector<2x128xf32>
    %47 = math.tanh %46 : vector<2x128xf32>
    %48 = arith.mulf %43, %47 : vector<2x128xf32>
    %c1 = arith.constant 1 : index
    %c0_29 = arith.constant 0 : index
    %c0_30 = arith.constant 0 : index
    %49 = vector.load %arg14[%c1, %c0_29, %c0_30] : memref<8x2x512xf32, #tpu.memory_space<vmem>>, vector<1x2x512xf32>
    %50 = vector.shape_cast %49 : vector<1x2x512xf32> to vector<2x512xf32>
    %c0_31 = arith.constant 0 : index
    %c0_32 = arith.constant 0 : index
    %51 = vector.load %arg7[%c0_31, %c0_32] : memref<128x512xf32, #tpu.memory_space<vmem>>, vector<128x512xf32>
    %cst_33 = arith.constant dense<0.000000e+00> : vector<2x512xf32>
    %52 = tpu.matmul %48, %51, %cst_33 {dimension_numbers = #tpu.dot_dimension_numbers<[1], [0], [0], [1], [0, 0, 1, 1], [], []>} : vector<2x128xf32>, vector<128x512xf32>, vector<2x512xf32> -> vector<2x512xf32>
    %53 = arith.addf %50, %52 : vector<2x512xf32>
    %54 = vector.extract_strided_slice %53 {offsets = [0, 0], sizes = [2, 128], strides = [1, 1]} : vector<2x512xf32> to vector<2x128xf32>
    %55 = arith.negf %54 : vector<2x128xf32>
    %56 = math.exp %55 : vector<2x128xf32>
    %cst_34 = arith.constant 1.000000e+00 : f32
    %57 = vector.broadcast %cst_34 : f32 to vector<2x128xf32>
    %58 = arith.addf %57, %56 : vector<2x128xf32>
    %59 = arith.divf %57, %58 : vector<2x128xf32>
    %60 = vector.extract_strided_slice %53 {offsets = [0, 128], sizes = [2, 128], strides = [1, 1]} : vector<2x512xf32> to vector<2x128xf32>
    %61 = arith.negf %60 : vector<2x128xf32>
    %62 = math.exp %61 : vector<2x128xf32>
    %cst_35 = arith.constant 1.000000e+00 : f32
    %63 = vector.broadcast %cst_35 : f32 to vector<2x128xf32>
    %64 = arith.addf %63, %62 : vector<2x128xf32>
    %65 = arith.divf %63, %64 : vector<2x128xf32>
    %66 = vector.extract_strided_slice %53 {offsets = [0, 256], sizes = [2, 128], strides = [1, 1]} : vector<2x512xf32> to vector<2x128xf32>
    %67 = math.tanh %66 : vector<2x128xf32>
    %68 = vector.extract_strided_slice %53 {offsets = [0, 384], sizes = [2, 128], strides = [1, 1]} : vector<2x512xf32> to vector<2x128xf32>
    %69 = arith.negf %68 : vector<2x128xf32>
    %70 = math.exp %69 : vector<2x128xf32>
    %cst_36 = arith.constant 1.000000e+00 : f32
    %71 = vector.broadcast %cst_36 : f32 to vector<2x128xf32>
    %72 = arith.addf %71, %70 : vector<2x128xf32>
    %73 = arith.divf %71, %72 : vector<2x128xf32>
    %74 = arith.mulf %65, %46 : vector<2x128xf32>
    %75 = arith.mulf %59, %67 : vector<2x128xf32>
    %76 = arith.addf %74, %75 : vector<2x128xf32>
    %77 = math.tanh %76 : vector<2x128xf32>
    %78 = arith.mulf %73, %77 : vector<2x128xf32>
    %c2 = arith.constant 2 : index
    %c0_37 = arith.constant 0 : index
    %c0_38 = arith.constant 0 : index
    %79 = vector.load %arg14[%c2, %c0_37, %c0_38] : memref<8x2x512xf32, #tpu.memory_space<vmem>>, vector<1x2x512xf32>
    %80 = vector.shape_cast %79 : vector<1x2x512xf32> to vector<2x512xf32>
    %c0_39 = arith.constant 0 : index
    %c0_40 = arith.constant 0 : index
    %81 = vector.load %arg7[%c0_39, %c0_40] : memref<128x512xf32, #tpu.memory_space<vmem>>, vector<128x512xf32>
    %cst_41 = arith.constant dense<0.000000e+00> : vector<2x512xf32>
    %82 = tpu.matmul %78, %81, %cst_41 {dimension_numbers = #tpu.dot_dimension_numbers<[1], [0], [0], [1], [0, 0, 1, 1], [], []>} : vector<2x128xf32>, vector<128x512xf32>, vector<2x512xf32> -> vector<2x512xf32>
    %83 = arith.addf %80, %82 : vector<2x512xf32>
    %84 = vector.extract_strided_slice %83 {offsets = [0, 0], sizes = [2, 128], strides = [1, 1]} : vector<2x512xf32> to vector<2x128xf32>
    %85 = arith.negf %84 : vector<2x128xf32>
    %86 = math.exp %85 : vector<2x128xf32>
    %cst_42 = arith.constant 1.000000e+00 : f32
    %87 = vector.broadcast %cst_42 : f32 to vector<2x128xf32>
    %88 = arith.addf %87, %86 : vector<2x128xf32>
    %89 = arith.divf %87, %88 : vector<2x128xf32>
    %90 = vector.extract_strided_slice %83 {offsets = [0, 128], sizes = [2, 128], strides = [1, 1]} : vector<2x512xf32> to vector<2x128xf32>
    %91 = arith.negf %90 : vector<2x128xf32>
    %92 = math.exp %91 : vector<2x128xf32>
    %cst_43 = arith.constant 1.000000e+00 : f32
    %93 = vector.broadcast %cst_43 : f32 to vector<2x128xf32>
    %94 = arith.addf %93, %92 : vector<2x128xf32>
    %95 = arith.divf %93, %94 : vector<2x128xf32>
    %96 = vector.extract_strided_slice %83 {offsets = [0, 256], sizes = [2, 128], strides = [1, 1]} : vector<2x512xf32> to vector<2x128xf32>
    %97 = math.tanh %96 : vector<2x128xf32>
    %98 = vector.extract_strided_slice %83 {offsets = [0, 384], sizes = [2, 128], strides = [1, 1]} : vector<2x512xf32> to vector<2x128xf32>
    %99 = arith.negf %98 : vector<2x128xf32>
    %100 = math.exp %99 : vector<2x128xf32>
    %cst_44 = arith.constant 1.000000e+00 : f32
    %101 = vector.broadcast %cst_44 : f32 to vector<2x128xf32>
    %102 = arith.addf %101, %100 : vector<2x128xf32>
    %103 = arith.divf %101, %102 : vector<2x128xf32>
    %104 = arith.mulf %95, %76 : vector<2x128xf32>
    %105 = arith.mulf %89, %97 : vector<2x128xf32>
    %106 = arith.addf %104, %105 : vector<2x128xf32>
    %107 = math.tanh %106 : vector<2x128xf32>
    %108 = arith.mulf %103, %107 : vector<2x128xf32>
    %c3 = arith.constant 3 : index
    %c0_45 = arith.constant 0 : index
    %c0_46 = arith.constant 0 : index
    %109 = vector.load %arg14[%c3, %c0_45, %c0_46] : memref<8x2x512xf32, #tpu.memory_space<vmem>>, vector<1x2x512xf32>
    %110 = vector.shape_cast %109 : vector<1x2x512xf32> to vector<2x512xf32>
    %c0_47 = arith.constant 0 : index
    %c0_48 = arith.constant 0 : index
    %111 = vector.load %arg7[%c0_47, %c0_48] : memref<128x512xf32, #tpu.memory_space<vmem>>, vector<128x512xf32>
    %cst_49 = arith.constant dense<0.000000e+00> : vector<2x512xf32>
    %112 = tpu.matmul %108, %111, %cst_49 {dimension_numbers = #tpu.dot_dimension_numbers<[1], [0], [0], [1], [0, 0, 1, 1], [], []>} : vector<2x128xf32>, vector<128x512xf32>, vector<2x512xf32> -> vector<2x512xf32>
    %113 = arith.addf %110, %112 : vector<2x512xf32>
    %114 = vector.extract_strided_slice %113 {offsets = [0, 0], sizes = [2, 128], strides = [1, 1]} : vector<2x512xf32> to vector<2x128xf32>
    %115 = arith.negf %114 : vector<2x128xf32>
    %116 = math.exp %115 : vector<2x128xf32>
    %cst_50 = arith.constant 1.000000e+00 : f32
    %117 = vector.broadcast %cst_50 : f32 to vector<2x128xf32>
    %118 = arith.addf %117, %116 : vector<2x128xf32>
    %119 = arith.divf %117, %118 : vector<2x128xf32>
    %120 = vector.extract_strided_slice %113 {offsets = [0, 128], sizes = [2, 128], strides = [1, 1]} : vector<2x512xf32> to vector<2x128xf32>
    %121 = arith.negf %120 : vector<2x128xf32>
    %122 = math.exp %121 : vector<2x128xf32>
    %cst_51 = arith.constant 1.000000e+00 : f32
    %123 = vector.broadcast %cst_51 : f32 to vector<2x128xf32>
    %124 = arith.addf %123, %122 : vector<2x128xf32>
    %125 = arith.divf %123, %124 : vector<2x128xf32>
    %126 = vector.extract_strided_slice %113 {offsets = [0, 256], sizes = [2, 128], strides = [1, 1]} : vector<2x512xf32> to vector<2x128xf32>
    %127 = math.tanh %126 : vector<2x128xf32>
    %128 = vector.extract_strided_slice %113 {offsets = [0, 384], sizes = [2, 128], strides = [1, 1]} : vector<2x512xf32> to vector<2x128xf32>
    %129 = arith.negf %128 : vector<2x128xf32>
    %130 = math.exp %129 : vector<2x128xf32>
    %cst_52 = arith.constant 1.000000e+00 : f32
    %131 = vector.broadcast %cst_52 : f32 to vector<2x128xf32>
    %132 = arith.addf %131, %130 : vector<2x128xf32>
    %133 = arith.divf %131, %132 : vector<2x128xf32>
    %134 = arith.mulf %125, %106 : vector<2x128xf32>
    %135 = arith.mulf %119, %127 : vector<2x128xf32>
    %136 = arith.addf %134, %135 : vector<2x128xf32>
    %137 = math.tanh %136 : vector<2x128xf32>
    %138 = arith.mulf %133, %137 : vector<2x128xf32>
    %c4 = arith.constant 4 : index
    %c0_53 = arith.constant 0 : index
    %c0_54 = arith.constant 0 : index
    %139 = vector.load %arg14[%c4, %c0_53, %c0_54] : memref<8x2x512xf32, #tpu.memory_space<vmem>>, vector<1x2x512xf32>
    %140 = vector.shape_cast %139 : vector<1x2x512xf32> to vector<2x512xf32>
    %c0_55 = arith.constant 0 : index
    %c0_56 = arith.constant 0 : index
    %141 = vector.load %arg7[%c0_55, %c0_56] : memref<128x512xf32, #tpu.memory_space<vmem>>, vector<128x512xf32>
    %cst_57 = arith.constant dense<0.000000e+00> : vector<2x512xf32>
    %142 = tpu.matmul %138, %141, %cst_57 {dimension_numbers = #tpu.dot_dimension_numbers<[1], [0], [0], [1], [0, 0, 1, 1], [], []>} : vector<2x128xf32>, vector<128x512xf32>, vector<2x512xf32> -> vector<2x512xf32>
    %143 = arith.addf %140, %142 : vector<2x512xf32>
    %144 = vector.extract_strided_slice %143 {offsets = [0, 0], sizes = [2, 128], strides = [1, 1]} : vector<2x512xf32> to vector<2x128xf32>
    %145 = arith.negf %144 : vector<2x128xf32>
    %146 = math.exp %145 : vector<2x128xf32>
    %cst_58 = arith.constant 1.000000e+00 : f32
    %147 = vector.broadcast %cst_58 : f32 to vector<2x128xf32>
    %148 = arith.addf %147, %146 : vector<2x128xf32>
    %149 = arith.divf %147, %148 : vector<2x128xf32>
    %150 = vector.extract_strided_slice %143 {offsets = [0, 128], sizes = [2, 128], strides = [1, 1]} : vector<2x512xf32> to vector<2x128xf32>
    %151 = arith.negf %150 : vector<2x128xf32>
    %152 = math.exp %151 : vector<2x128xf32>
    %cst_59 = arith.constant 1.000000e+00 : f32
    %153 = vector.broadcast %cst_59 : f32 to vector<2x128xf32>
    %154 = arith.addf %153, %152 : vector<2x128xf32>
    %155 = arith.divf %153, %154 : vector<2x128xf32>
    %156 = vector.extract_strided_slice %143 {offsets = [0, 256], sizes = [2, 128], strides = [1, 1]} : vector<2x512xf32> to vector<2x128xf32>
    %157 = math.tanh %156 : vector<2x128xf32>
    %158 = vector.extract_strided_slice %143 {offsets = [0, 384], sizes = [2, 128], strides = [1, 1]} : vector<2x512xf32> to vector<2x128xf32>
    %159 = arith.negf %158 : vector<2x128xf32>
    %160 = math.exp %159 : vector<2x128xf32>
    %cst_60 = arith.constant 1.000000e+00 : f32
    %161 = vector.broadcast %cst_60 : f32 to vector<2x128xf32>
    %162 = arith.addf %161, %160 : vector<2x128xf32>
    %163 = arith.divf %161, %162 : vector<2x128xf32>
    %164 = arith.mulf %155, %136 : vector<2x128xf32>
    %165 = arith.mulf %149, %157 : vector<2x128xf32>
    %166 = arith.addf %164, %165 : vector<2x128xf32>
    %167 = math.tanh %166 : vector<2x128xf32>
    %168 = arith.mulf %163, %167 : vector<2x128xf32>
    %c5 = arith.constant 5 : index
    %c0_61 = arith.constant 0 : index
    %c0_62 = arith.constant 0 : index
    %169 = vector.load %arg14[%c5, %c0_61, %c0_62] : memref<8x2x512xf32, #tpu.memory_space<vmem>>, vector<1x2x512xf32>
    %170 = vector.shape_cast %169 : vector<1x2x512xf32> to vector<2x512xf32>
    %c0_63 = arith.constant 0 : index
    %c0_64 = arith.constant 0 : index
    %171 = vector.load %arg7[%c0_63, %c0_64] : memref<128x512xf32, #tpu.memory_space<vmem>>, vector<128x512xf32>
    %cst_65 = arith.constant dense<0.000000e+00> : vector<2x512xf32>
    %172 = tpu.matmul %168, %171, %cst_65 {dimension_numbers = #tpu.dot_dimension_numbers<[1], [0], [0], [1], [0, 0, 1, 1], [], []>} : vector<2x128xf32>, vector<128x512xf32>, vector<2x512xf32> -> vector<2x512xf32>
    %173 = arith.addf %170, %172 : vector<2x512xf32>
    %174 = vector.extract_strided_slice %173 {offsets = [0, 0], sizes = [2, 128], strides = [1, 1]} : vector<2x512xf32> to vector<2x128xf32>
    %175 = arith.negf %174 : vector<2x128xf32>
    %176 = math.exp %175 : vector<2x128xf32>
    %cst_66 = arith.constant 1.000000e+00 : f32
    %177 = vector.broadcast %cst_66 : f32 to vector<2x128xf32>
    %178 = arith.addf %177, %176 : vector<2x128xf32>
    %179 = arith.divf %177, %178 : vector<2x128xf32>
    %180 = vector.extract_strided_slice %173 {offsets = [0, 128], sizes = [2, 128], strides = [1, 1]} : vector<2x512xf32> to vector<2x128xf32>
    %181 = arith.negf %180 : vector<2x128xf32>
    %182 = math.exp %181 : vector<2x128xf32>
    %cst_67 = arith.constant 1.000000e+00 : f32
    %183 = vector.broadcast %cst_67 : f32 to vector<2x128xf32>
    %184 = arith.addf %183, %182 : vector<2x128xf32>
    %185 = arith.divf %183, %184 : vector<2x128xf32>
    %186 = vector.extract_strided_slice %173 {offsets = [0, 256], sizes = [2, 128], strides = [1, 1]} : vector<2x512xf32> to vector<2x128xf32>
    %187 = math.tanh %186 : vector<2x128xf32>
    %188 = vector.extract_strided_slice %173 {offsets = [0, 384], sizes = [2, 128], strides = [1, 1]} : vector<2x512xf32> to vector<2x128xf32>
    %189 = arith.negf %188 : vector<2x128xf32>
    %190 = math.exp %189 : vector<2x128xf32>
    %cst_68 = arith.constant 1.000000e+00 : f32
    %191 = vector.broadcast %cst_68 : f32 to vector<2x128xf32>
    %192 = arith.addf %191, %190 : vector<2x128xf32>
    %193 = arith.divf %191, %192 : vector<2x128xf32>
    %194 = arith.mulf %185, %166 : vector<2x128xf32>
    %195 = arith.mulf %179, %187 : vector<2x128xf32>
    %196 = arith.addf %194, %195 : vector<2x128xf32>
    %197 = math.tanh %196 : vector<2x128xf32>
    %198 = arith.mulf %193, %197 : vector<2x128xf32>
    %c6 = arith.constant 6 : index
    %c0_69 = arith.constant 0 : index
    %c0_70 = arith.constant 0 : index
    %199 = vector.load %arg14[%c6, %c0_69, %c0_70] : memref<8x2x512xf32, #tpu.memory_space<vmem>>, vector<1x2x512xf32>
    %200 = vector.shape_cast %199 : vector<1x2x512xf32> to vector<2x512xf32>
    %c0_71 = arith.constant 0 : index
    %c0_72 = arith.constant 0 : index
    %201 = vector.load %arg7[%c0_71, %c0_72] : memref<128x512xf32, #tpu.memory_space<vmem>>, vector<128x512xf32>
    %cst_73 = arith.constant dense<0.000000e+00> : vector<2x512xf32>
    %202 = tpu.matmul %198, %201, %cst_73 {dimension_numbers = #tpu.dot_dimension_numbers<[1], [0], [0], [1], [0, 0, 1, 1], [], []>} : vector<2x128xf32>, vector<128x512xf32>, vector<2x512xf32> -> vector<2x512xf32>
    %203 = arith.addf %200, %202 : vector<2x512xf32>
    %204 = vector.extract_strided_slice %203 {offsets = [0, 0], sizes = [2, 128], strides = [1, 1]} : vector<2x512xf32> to vector<2x128xf32>
    %205 = arith.negf %204 : vector<2x128xf32>
    %206 = math.exp %205 : vector<2x128xf32>
    %cst_74 = arith.constant 1.000000e+00 : f32
    %207 = vector.broadcast %cst_74 : f32 to vector<2x128xf32>
    %208 = arith.addf %207, %206 : vector<2x128xf32>
    %209 = arith.divf %207, %208 : vector<2x128xf32>
    %210 = vector.extract_strided_slice %203 {offsets = [0, 128], sizes = [2, 128], strides = [1, 1]} : vector<2x512xf32> to vector<2x128xf32>
    %211 = arith.negf %210 : vector<2x128xf32>
    %212 = math.exp %211 : vector<2x128xf32>
    %cst_75 = arith.constant 1.000000e+00 : f32
    %213 = vector.broadcast %cst_75 : f32 to vector<2x128xf32>
    %214 = arith.addf %213, %212 : vector<2x128xf32>
    %215 = arith.divf %213, %214 : vector<2x128xf32>
    %216 = vector.extract_strided_slice %203 {offsets = [0, 256], sizes = [2, 128], strides = [1, 1]} : vector<2x512xf32> to vector<2x128xf32>
    %217 = math.tanh %216 : vector<2x128xf32>
    %218 = vector.extract_strided_slice %203 {offsets = [0, 384], sizes = [2, 128], strides = [1, 1]} : vector<2x512xf32> to vector<2x128xf32>
    %219 = arith.negf %218 : vector<2x128xf32>
    %220 = math.exp %219 : vector<2x128xf32>
    %cst_76 = arith.constant 1.000000e+00 : f32
    %221 = vector.broadcast %cst_76 : f32 to vector<2x128xf32>
    %222 = arith.addf %221, %220 : vector<2x128xf32>
    %223 = arith.divf %221, %222 : vector<2x128xf32>
    %224 = arith.mulf %215, %196 : vector<2x128xf32>
    %225 = arith.mulf %209, %217 : vector<2x128xf32>
    %226 = arith.addf %224, %225 : vector<2x128xf32>
    %227 = math.tanh %226 : vector<2x128xf32>
    %228 = arith.mulf %223, %227 : vector<2x128xf32>
    %c7 = arith.constant 7 : index
    %c0_77 = arith.constant 0 : index
    %c0_78 = arith.constant 0 : index
    %229 = vector.load %arg14[%c7, %c0_77, %c0_78] : memref<8x2x512xf32, #tpu.memory_space<vmem>>, vector<1x2x512xf32>
    %230 = vector.shape_cast %229 : vector<1x2x512xf32> to vector<2x512xf32>
    %c0_79 = arith.constant 0 : index
    %c0_80 = arith.constant 0 : index
    %231 = vector.load %arg7[%c0_79, %c0_80] : memref<128x512xf32, #tpu.memory_space<vmem>>, vector<128x512xf32>
    %cst_81 = arith.constant dense<0.000000e+00> : vector<2x512xf32>
    %232 = tpu.matmul %228, %231, %cst_81 {dimension_numbers = #tpu.dot_dimension_numbers<[1], [0], [0], [1], [0, 0, 1, 1], [], []>} : vector<2x128xf32>, vector<128x512xf32>, vector<2x512xf32> -> vector<2x512xf32>
    %233 = arith.addf %230, %232 : vector<2x512xf32>
    %234 = vector.extract_strided_slice %233 {offsets = [0, 0], sizes = [2, 128], strides = [1, 1]} : vector<2x512xf32> to vector<2x128xf32>
    %235 = arith.negf %234 : vector<2x128xf32>
    %236 = math.exp %235 : vector<2x128xf32>
    %cst_82 = arith.constant 1.000000e+00 : f32
    %237 = vector.broadcast %cst_82 : f32 to vector<2x128xf32>
    %238 = arith.addf %237, %236 : vector<2x128xf32>
    %239 = arith.divf %237, %238 : vector<2x128xf32>
    %240 = vector.extract_strided_slice %233 {offsets = [0, 128], sizes = [2, 128], strides = [1, 1]} : vector<2x512xf32> to vector<2x128xf32>
    %241 = arith.negf %240 : vector<2x128xf32>
    %242 = math.exp %241 : vector<2x128xf32>
    %cst_83 = arith.constant 1.000000e+00 : f32
    %243 = vector.broadcast %cst_83 : f32 to vector<2x128xf32>
    %244 = arith.addf %243, %242 : vector<2x128xf32>
    %245 = arith.divf %243, %244 : vector<2x128xf32>
    %246 = vector.extract_strided_slice %233 {offsets = [0, 256], sizes = [2, 128], strides = [1, 1]} : vector<2x512xf32> to vector<2x128xf32>
    %247 = math.tanh %246 : vector<2x128xf32>
    %248 = vector.extract_strided_slice %233 {offsets = [0, 384], sizes = [2, 128], strides = [1, 1]} : vector<2x512xf32> to vector<2x128xf32>
    %249 = arith.negf %248 : vector<2x128xf32>
    %250 = math.exp %249 : vector<2x128xf32>
    %cst_84 = arith.constant 1.000000e+00 : f32
    %251 = vector.broadcast %cst_84 : f32 to vector<2x128xf32>
    %252 = arith.addf %251, %250 : vector<2x128xf32>
    %253 = arith.divf %251, %252 : vector<2x128xf32>
    %254 = arith.mulf %245, %226 : vector<2x128xf32>
    %255 = arith.mulf %239, %247 : vector<2x128xf32>
    %256 = arith.addf %254, %255 : vector<2x128xf32>
    %257 = math.tanh %256 : vector<2x128xf32>
    %258 = arith.mulf %253, %257 : vector<2x128xf32>
    %cst_85 = arith.constant 0.000000e+00 : f32
    %259 = vector.broadcast %cst_85 : f32 to vector<2x128xf32>
    %260 = arith.maximumf %258, %259 : vector<2x128xf32>
    %c0_86 = arith.constant 0 : index
    %c0_87 = arith.constant 0 : index
    %261 = vector.load %arg9[%c0_86, %c0_87] : memref<128x128xf32, #tpu.memory_space<vmem>>, vector<128x128xf32>
    %cst_88 = arith.constant dense<0.000000e+00> : vector<2x128xf32>
    %262 = tpu.matmul %260, %261, %cst_88 {dimension_numbers = #tpu.dot_dimension_numbers<[1], [0], [0], [1], [0, 0, 1, 1], [], []>} : vector<2x128xf32>, vector<128x128xf32>, vector<2x128xf32> -> vector<2x128xf32>
    %c0_89 = arith.constant 0 : index
    %c0_90 = arith.constant 0 : index
    %263 = vector.load %arg10[%c0_89, %c0_90] : memref<1x128xf32, #tpu.memory_space<vmem>>, vector<1x128xf32>
    %264 = vector.broadcast %263 : vector<1x128xf32> to vector<2x128xf32>
    %265 = arith.addf %262, %264 : vector<2x128xf32>
    %266 = math.tanh %265 : vector<2x128xf32>
    %c0_91 = arith.constant 0 : index
    %c0_92 = arith.constant 0 : index
    %267 = vector.load %arg11[%c0_91, %c0_92] : memref<2x128xf32, #tpu.memory_space<vmem>>, vector<2x128xf32>
    tpu.vector_store %arg11[%c0_91, %c0_92], %266 {strides = array<i32>} : memref<2x128xf32, #tpu.memory_space<vmem>>, vector<2x128xf32>,
    %c0_93 = arith.constant 0 : index
    %c0_94 = arith.constant 0 : index
    %268 = vector.load %arg12[%c0_93, %c0_94] : memref<2x128xf32, #tpu.memory_space<vmem>>, vector<2x128xf32>
    tpu.vector_store %arg12[%c0_93, %c0_94], %258 {strides = array<i32>} : memref<2x128xf32, #tpu.memory_space<vmem>>, vector<2x128xf32>,
    %c0_95 = arith.constant 0 : index
    %c0_96 = arith.constant 0 : index
    %269 = vector.load %arg13[%c0_95, %c0_96] : memref<2x128xf32, #tpu.memory_space<vmem>>, vector<2x128xf32>
    tpu.vector_store %arg13[%c0_95, %c0_96], %256 {strides = array<i32>} : memref<2x128xf32, #tpu.memory_space<vmem>>, vector<2x128xf32>,
    return
  }
  func.func @transform_0(%arg0: i32) -> (i32, i32, i32) {
    %c0_i32 = arith.constant 0 : i32
    %c0_i32_0 = arith.constant 0 : i32
    %c0_i32_1 = arith.constant 0 : i32
    return %c0_i32, %arg0, %c0_i32_0 : i32, i32, i32
  }
  func.func @transform_1(%arg0: i32) -> (i32, i32, i32) {
    %c0_i32 = arith.constant 0 : i32
    %c0_i32_0 = arith.constant 0 : i32
    %c0_i32_1 = arith.constant 0 : i32
    return %c0_i32, %arg0, %c0_i32_0 : i32, i32, i32
  }
  func.func @transform_2(%arg0: i32) -> (i32, i32) {
    %c0_i32 = arith.constant 0 : i32
    %c0_i32_0 = arith.constant 0 : i32
    return %arg0, %c0_i32 : i32, i32
  }
  func.func @transform_3(%arg0: i32) -> (i32, i32) {
    %c0_i32 = arith.constant 0 : i32
    %c0_i32_0 = arith.constant 0 : i32
    return %arg0, %c0_i32 : i32, i32
  }
  func.func @transform_4(%arg0: i32) -> (i32, i32) {
    %c0_i32 = arith.constant 0 : i32
    %c0_i32_0 = arith.constant 0 : i32
    %c0_i32_1 = arith.constant 0 : i32
    return %c0_i32, %c0_i32_0 : i32, i32
  }
  func.func @transform_5(%arg0: i32) -> (i32, i32) {
    %c0_i32 = arith.constant 0 : i32
    %c0_i32_0 = arith.constant 0 : i32
    %c0_i32_1 = arith.constant 0 : i32
    return %c0_i32, %c0_i32_0 : i32, i32
  }
  func.func @transform_6(%arg0: i32) -> (i32, i32) {
    %c0_i32 = arith.constant 0 : i32
    %c0_i32_0 = arith.constant 0 : i32
    %c0_i32_1 = arith.constant 0 : i32
    return %c0_i32, %c0_i32_0 : i32, i32
  }
  func.func @transform_7(%arg0: i32) -> (i32, i32) {
    %c0_i32 = arith.constant 0 : i32
    %c0_i32_0 = arith.constant 0 : i32
    %c0_i32_1 = arith.constant 0 : i32
    return %c0_i32, %c0_i32_0 : i32, i32
  }
  func.func @transform_8(%arg0: i32) -> (i32, i32) {
    %c0_i32 = arith.constant 0 : i32
    %c0_i32_0 = arith.constant 0 : i32
    %c0_i32_1 = arith.constant 0 : i32
    return %c0_i32, %c0_i32_0 : i32, i32
  }
  func.func @transform_9(%arg0: i32) -> (i32, i32) {
    %c0_i32 = arith.constant 0 : i32
    %c0_i32_0 = arith.constant 0 : i32
    %c0_i32_1 = arith.constant 0 : i32
    return %c0_i32, %c0_i32_0 : i32, i32
  }
  func.func @transform_10(%arg0: i32) -> (i32, i32) {
    %c0_i32 = arith.constant 0 : i32
    %c0_i32_0 = arith.constant 0 : i32
    return %arg0, %c0_i32 : i32, i32
  }
  func.func @transform_11(%arg0: i32) -> (i32, i32) {
    %c0_i32 = arith.constant 0 : i32
    %c0_i32_0 = arith.constant 0 : i32
    return %arg0, %c0_i32 : i32, i32
  }
  func.func @transform_12(%arg0: i32) -> (i32, i32) {
    %c0_i32 = arith.constant 0 : i32
    %c0_i32_0 = arith.constant 0 : i32
    return %arg0, %c0_i32 : i32, i32
  }
}

</mosaic_0001>

<llo_original>
// kernel: tpu_custom_call.1
$region0: #{tpu_custom_call.1}
  #allocation0 [shape = 'u32[]', space=smem, size = 0x4, offset = 0x4, fixed_abs, tag = 'smem constant byte address 0x4 - core index']
  #allocation1 [shape = 'u32[144,128]{1,0:T(1,128)}', space=vmem, size = 0x12000, scoped, tag = 'internal scratch']
  #allocation2 [shape = 'f32[8,2,512]{2,1,0:T(2,128)}', space=vmem, size = 0x8000, scoped, tag = 'scratch operand']
  %s0 = inlined_call_operand.vmem [shape: f32[8,2,4], index: 0, kind: input, shape index: {}]
  %s1 = inlined_call_operand.vmem [shape: f32[8,2,2], index: 1, kind: input, shape index: {}]
  %s2 = inlined_call_operand.vmem [shape: f32[2,64], index: 2, kind: input, shape index: {}]
  %s3 = inlined_call_operand.vmem [shape: f32[2,64], index: 3, kind: input, shape index: {}]
  %s4 = inlined_call_operand.vmem [shape: f32[4,512], index: 4, kind: input, shape index: {}]
  %s5 = inlined_call_operand.vmem [shape: f32[2,512], index: 5, kind: input, shape index: {}]
  %s6 = inlined_call_operand.hbm [shape: f32[128,512], index: 6, kind: input, shape index: {}]
  %s7 = inlined_call_operand.vmem [shape: f32[1,512], index: 7, kind: input, shape index: {}]
  %s8 = inlined_call_operand.hbm [shape: f32[128,128], index: 8, kind: input, shape index: {}]
  %s9 = inlined_call_operand.vmem [shape: f32[1,128], index: 9, kind: input, shape index: {}]
  %s10 = inlined_call_operand.hbm [shape: f32[2,128], index: 10, kind: output, shape index: {0}]
  %s11 = inlined_call_operand.hbm [shape: f32[2,128], index: 11, kind: output, shape index: {1}]
  %s12 = inlined_call_operand.hbm [shape: f32[2,128], index: 12, kind: output, shape index: {2}]
  %13 = xla_tuple %s10, %s11, %s12
  %s14 = sld [smem:[#allocation0]]
  $region74: #{tpu_custom_call.1} parent=0
    _
  %s16 = ssub.s32 1, %s14
  %s17 = scalar_select 0, %s16, %s14
  $region1: #{tpu_custom_call.1} parent=0
    #allocation3 [shape = 'u8[262144]{0}', space=vmem, size = 0x40000, scoped, tag = 'input window, operand 6, single buffered']
    #allocation4 [shape = 's32[1]{0}', space=sflag, size = 0x4, scoped, tag = 'scoped memory for tpu_custom_call.1']
    #allocation5 [shape = 's32[1]{0}', space=sflag, size = 0x4, scoped, tag = 'scoped memory for tpu_custom_call.1']
    #allocation6 [shape = 'u8[65536]{0}', space=vmem, size = 0x10000, scoped, tag = 'input window, operand 8, single buffered']
    #allocation7 [shape = 's32[1]{0}', space=sflag, size = 0x4, scoped, tag = 'scoped memory for tpu_custom_call.1']
    #allocation8 [shape = 'u8[1024]{0}', space=vmem, size = 0x400, scoped, tag = 'output window, operand 0, single buffered']
    #allocation9 [shape = 'u8[1024]{0}', space=vmem, size = 0x400, scoped, tag = 'output window, operand 1, single buffered']
    #allocation10 [shape = 's32[1]{0}', space=sflag, size = 0x4, scoped, tag = 'scoped memory for tpu_custom_call.1']
    #allocation11 [shape = 'u8[1024]{0}', space=vmem, size = 0x400, scoped, tag = 'output window, operand 2, single buffered']
    %18 = vsyncpa [#allocation4], 0
    %19 = vsyncpa [#allocation7], 0
    %20 = vsyncpa [#allocation5], 0
    %21 = vsyncpa [#allocation10], 0
    // Predicated region
    $region2: #{tpu_custom_call.1} parent=1 // pred_check
      _
    $region3: #{tpu_custom_call.1} parent=1 // pred_check_branch
      %23 = sbr.rel (0) target = $region5
    $region4: #{tpu_custom_call.1} parent=1 // pred_region
      _
    $region5: #{tpu_custom_call.1} parent=1 // pred_fallthru
      _
    // Predicated region
    $region6: #{tpu_custom_call.1} parent=1 // pred_check
      _
    $region7: #{tpu_custom_call.1} parent=1 // pred_check_branch
      %25 = sbr.rel (0) target = $region9
    $region8: #{tpu_custom_call.1} parent=1 // pred_region
      _
    $region9: #{tpu_custom_call.1} parent=1 // pred_fallthru
      _
    // Predicated region
    $region10: #{tpu_custom_call.1} parent=1 // pred_check
      _
    $region11: #{tpu_custom_call.1} parent=1 // pred_check_branch
      %27 = sbr.rel (0) target = $region13
    $region12: #{tpu_custom_call.1} parent=1 // pred_region
      _
    $region13: #{tpu_custom_call.1} parent=1 // pred_fallthru
      _
    // Predicated region
    $region14: #{tpu_custom_call.1} parent=1 // pred_check
      _
    $region15: #{tpu_custom_call.1} parent=1 // pred_check_branch
      %29 = sbr.rel (0) target = $region17
    $region16: #{tpu_custom_call.1} parent=1 // pred_region
      _
    $region17: #{tpu_custom_call.1} parent=1 // pred_fallthru
      _
    // Predicated region
    $region18: #{tpu_custom_call.1} parent=1 // pred_check
      _
    $region19: #{tpu_custom_call.1} parent=1 // pred_check_branch
      %31 = sbr.rel (0) target = $region21
    $region20: #{tpu_custom_call.1} parent=1 // pred_region
      _
    $region21: #{tpu_custom_call.1} parent=1 // pred_fallthru
      _
    // Predicated region
    $region22: #{tpu_custom_call.1} parent=1 // pred_check
      _
    $region23: #{tpu_custom_call.1} parent=1 // pred_check_branch
      %33 = sbr.rel (0) target = $region25
    $region24: #{tpu_custom_call.1} parent=1 // pred_region
      _
    $region25: #{tpu_custom_call.1} parent=1 // pred_fallthru
      _
    // Predicated region
    $region26: #{tpu_custom_call.1} parent=1 // pred_check
      _
    $region27: #{tpu_custom_call.1} parent=1 // pred_check_branch
      %35 = sbr.rel (0) target = $region29
    $region28: #{tpu_custom_call.1} parent=1 // pred_region
      %s37 = ssub.s32 8192, 8192
      %38 = vsyncadd [#allocation4], %s37
      %s39 = sshll.u32 [#allocation3], 4
      %s40 = int_to_ptr.vmem [resolvable:$true] %s39
      %45 = dma.hbm_to_vmem [thread:$0]  %s6, 8192, %s40, [#allocation4], 512, 512, 32
    $region29: #{tpu_custom_call.1} parent=1 // pred_fallthru
      _
    // Predicated region
    $region30: #{tpu_custom_call.1} parent=1 // pred_check
      _
    $region31: #{tpu_custom_call.1} parent=1 // pred_check_branch
      %47 = sbr.rel (0) target = $region33
    $region32: #{tpu_custom_call.1} parent=1 // pred_region
      _
    $region33: #{tpu_custom_call.1} parent=1 // pred_fallthru
      _
    // Predicated region
    $region34: #{tpu_custom_call.1} parent=1 // pred_check
      _
    $region35: #{tpu_custom_call.1} parent=1 // pred_check_branch
      %49 = sbr.rel (0) target = $region37
    $region36: #{tpu_custom_call.1} parent=1 // pred_region
      %s51 = ssub.s32 2048, 2048
      %52 = vsyncadd [#allocation7], %s51
      %s53 = sshll.u32 [#allocation6], 4
      %s54 = int_to_ptr.vmem [resolvable:$true] %s53
      %59 = dma.hbm_to_vmem [thread:$0]  %s8, 2048, %s54, [#allocation7], 128, 128, 8
    $region37: #{tpu_custom_call.1} parent=1 // pred_fallthru
      _
    // Predicated region
    $region38: #{tpu_custom_call.1} parent=1 // pred_check
      _
    $region39: #{tpu_custom_call.1} parent=1 // pred_check_branch
      %61 = sbr.rel (0) target = $region41
    $region40: #{tpu_custom_call.1} parent=1 // pred_region
      _
    $region41: #{tpu_custom_call.1} parent=1 // pred_fallthru
      _
    // Predicated region
    $region42: #{tpu_custom_call.1} parent=1 // pred_check
      _
    $region43: #{tpu_custom_call.1} parent=1 // pred_check_branch
      %63 = sbr.rel (0) target = $region45
    $region44: #{tpu_custom_call.1} parent=1 // pred_region
      %64 = dma.done [#allocation4], 8192
    $region45: #{tpu_custom_call.1} parent=1 // pred_fallthru
      _
    // Predicated region
    $region46: #{tpu_custom_call.1} parent=1 // pred_check
      _
    $region47: #{tpu_custom_call.1} parent=1 // pred_check_branch
      %66 = sbr.rel (0) target = $region49
    $region48: #{tpu_custom_call.1} parent=1 // pred_region
      %67 = dma.done [#allocation7], 2048
    $region49: #{tpu_custom_call.1} parent=1 // pred_fallthru
      _
    %v68 = vld [vmem:[%s0] sm:$0x3]
    %v69 = vld [vmem:[%s0 + $0x2] sm:$0x3]
    %v70 = vld [vmem:[%s0 + $0x4] sm:$0x3]
    %v71 = vld [vmem:[%s0 + $0x6] sm:$0x3]
    %v72 = vld [vmem:[%s0 + $0x8] sm:$0x3]
    %v73 = vld [vmem:[%s0 + $0xa] sm:$0x3]
    %v74 = vld [vmem:[%s0 + $0xc] sm:$0x3]
    %v75 = vld [vmem:[%s0 + $0xe] sm:$0x3]
    %v76 = vld [vmem:[%s1] sm:$0x3]
    %v77 = vld [vmem:[%s1 + $0x2] sm:$0x3]
    %v78 = vld [vmem:[%s1 + $0x4] sm:$0x3]
    %v79 = vld [vmem:[%s1 + $0x6] sm:$0x3]
    %v80 = vld [vmem:[%s1 + $0x8] sm:$0x3]
    %v81 = vld [vmem:[%s1 + $0xa] sm:$0x3]
    %v82 = vld [vmem:[%s1 + $0xc] sm:$0x3]
    %v83 = vld [vmem:[%s1 + $0xe] sm:$0x3]
    %v84 = vld [vmem:[%s4] sm:$0xff]
    %v85 = vld [vmem:[%s4 + $0x8] sm:$0xff]
    %v86 = vld [vmem:[%s5] sm:$0xff]
    %v95 = vcombine.low %v76, %v77
    %v96 = vcombine.low %v78, %v79
    %v98 = vunpack.c.l.s4 1983009808
    %v99 = vunpack.c.0.s8 %v98
    %v100 = vlaneseq
    %v101 = vshrl.u32 %v100, 7
    %v102 = vsub.s32 %v99, %v101
    %v103 = vrot.slane %v95, %v102
    %v105 = vunpack.c.l.s4 1983009808
    %v106 = vunpack.c.0.s8 %v105
    %v107 = vlaneseq
    %v108 = vshrl.u32 %v107, 7
    %v109 = vsub.s32 %v106, %v108
    %v110 = vrot.slane %v96, %v109
    %v111 = vcombine.low %v103, %v110
    %v112 = vcombine.low %v80, %v81
    %v113 = vcombine.low %v82, %v83
    %v115 = vunpack.c.l.s4 1983009808
    %v116 = vunpack.c.0.s8 %v115
    %v117 = vlaneseq
    %v118 = vshrl.u32 %v117, 7
    %v119 = vsub.s32 %v116, %v118
    %v120 = vrot.slane %v112, %v119
    %v122 = vunpack.c.l.s4 1983009808
    %v123 = vunpack.c.0.s8 %v122
    %v124 = vlaneseq
    %v125 = vshrl.u32 %v124, 7
    %v126 = vsub.s32 %v123, %v125
    %v127 = vrot.slane %v113, %v126
    %v128 = vcombine.low %v120, %v127
    %v130 = vcombine.high %v86, %v86
    %v132 = vunpack.c.l.s4 1983009808
    %v133 = vunpack.c.0.s8 %v132
    %v134 = vlaneseq
    %v135 = vshrl.u32 %v134, 7
    %v136 = vsub.s32 %v133, %v135
    %v137 = vrot.slane %v86, %v136
    %v139 = vunpack.c.l.s4 1983009808
    %v140 = vunpack.c.0.s8 %v139
    %v141 = vlaneseq
    %v142 = vshrl.u32 %v141, 7
    %v143 = vsub.s32 %v140, %v142
    %v144 = vrot.slane %v130, %v143
    %v145 = vcombine.high %v137, %v137
    %v146 = vcombine.high %v144, %v144
    %vm147 = vcmask 15360
    %v148 = vsel %vm147, %v111, 0
    %v150 = vsel %vm147, %v128, 0
    %vm152 = vcmask 1041408
    %v153 = vsel %vm152, %v137, 0
    %v155 = vsel %vm152, %v145, 0
    %v157 = vsel %vm152, %v144, 0
    %v159 = vsel %vm152, %v146, 0
    %161 = vmatprep.subr.mxu0 %v155
    %162 = vmatpush1.msra.mxu0 %v153
    %163 = vmatprep.subr.mxu0 0.0
    %164 = vmatpush1.msra.mxu0 0.0
    %165 = vmatprep.subr.mxu0 0.0
    %166 = vmatpush1.msra.mxu0 0.0
    %167 = vmatprep.subr.mxu0 0.0
    %168 = vmatpush1.msra.mxu0 0.0
    %169 = vmatprep.subr.mxu0 0.0
    %170 = vmatpush1.msra.mxu0 0.0
    %171 = vmatprep.subr.mxu0 0.0
    %172 = vmatpush1.msra.mxu0 0.0
    %173 = vmatprep.subr.mxu0 0.0
    %174 = vmatpush1.msra.mxu0 0.0
    %175 = vmatprep.subr.mxu0 0.0
    %176 = vmatpush1.msra.mxu0 0.0
    %177 = vmatprep.subr.mxu0 0.0
    %178 = vmatpush1.msra.mxu0 0.0
    %179 = vmatprep.subr.mxu0 0.0
    %180 = vmatpush1.msra.mxu0 0.0
    %181 = vmatprep.subr.mxu0 0.0
    %182 = vmatpush1.msra.mxu0 0.0
    %183 = vmatprep.subr.mxu0 0.0
    %184 = vmatpush1.msra.mxu0 0.0
    %185 = vmatprep.subr.mxu0 0.0
    %186 = vmatpush1.msra.mxu0 0.0
    %187 = vmatprep.subr.mxu0 0.0
    %188 = vmatpush1.msra.mxu0 0.0
    %189 = vmatprep.subr.mxu0 0.0
    %190 = vmatpush1.msra.mxu0 0.0
    %191 = vmatprep.subr.mxu0 0.0
    %192 = vmatpush1.msra.mxu0 0.0
    %193 = vmatprep.subr.mxu0 0.0
    %194 = vmatpush1.msra.mxu0 0.0
    %195 = vmatprep.subr.mxu0 0.0
    %196 = vmatpush1.msra.mxu0 0.0
    %197 = vmatprep.subr.mxu0 0.0
    %198 = vmatpush1.msra.mxu0 0.0
    %199 = vmatprep.subr.mxu0 0.0
    %200 = vmatpush1.msra.mxu0 0.0
    %201 = vmatprep.subr.mxu0 0.0
    %202 = vmatpush1.msra.mxu0 0.0
    %203 = vmatprep.subr.mxu0 0.0
    %204 = vmatpush1.msra.mxu0 0.0
    %205 = vmatprep.subr.mxu0 0.0
    %206 = vmatpush1.msra.mxu0 0.0
    %207 = vmatprep.subr.mxu0 0.0
    %208 = vmatpush1.msra.mxu0 0.0
    %209 = vmatprep.subr.mxu0 0.0
    %210 = vmatpush1.msra.mxu0 0.0
    %211 = vmatprep.subr.mxu0 0.0
    %212 = vmatpush1.msra.mxu0 0.0
    %213 = vmatprep.subr.mxu0 0.0
    %214 = vmatpush1.msra.mxu0 0.0
    %215 = vmatprep.subr.mxu0 0.0
    %216 = vmatpush1.msra.mxu0 0.0
    %217 = vmatprep.subr.mxu0 0.0
    %218 = vmatpush1.msra.mxu0 0.0
    %219 = vmatprep.subr.mxu0 0.0
    %220 = vmatpush1.msra.mxu0 0.0
    %221 = vmatprep.subr.mxu0 0.0
    %222 = vmatpush1.msra.mxu0 0.0
    %223 = vmatprep.subr.mxu0 0.0
    %224 = vmatpush1.msra.mxu0 0.0
    %225 = vmatprep.mubr.f32.mxu0 0.0
    %226 = vmatmul.mubr.f32.gmra.mrb[0].mxu0 %v148
    %v227 = vpop.f32.mrb[0].mxu0
    %v228 = vadd.f32 0.0, %v227
    %v229 = vpop.f32.mrb[0].mxu0
    %v230 = vadd.f32 0.0, %v229
    %231 = vmatprep.mubr.f32.mxu0 0.0
    %232 = vmatmul.mubr.f32.gmra.mrb[0].mxu0 %v150
    %v233 = vpop.f32.mrb[0].mxu0
    %v234 = vadd.f32 0.0, %v233
    %v235 = vpop.f32.mrb[0].mxu0
    %v236 = vadd.f32 0.0, %v235
    %237 = vdwg.mxu0
    %238 = vmatprep.subr.mxu0 %v159
    %239 = vmatpush1.msra.mxu0 %v157
    %240 = vmatprep.subr.mxu0 0.0
    %241 = vmatpush1.msra.mxu0 0.0
    %242 = vmatprep.subr.mxu0 0.0
    %243 = vmatpush1.msra.mxu0 0.0
    %244 = vmatprep.subr.mxu0 0.0
    %245 = vmatpush1.msra.mxu0 0.0
    %246 = vmatprep.subr.mxu0 0.0
    %247 = vmatpush1.msra.mxu0 0.0
    %248 = vmatprep.subr.mxu0 0.0
    %249 = vmatpush1.msra.mxu0 0.0
    %250 = vmatprep.subr.mxu0 0.0
    %251 = vmatpush1.msra.mxu0 0.0
    %252 = vmatprep.subr.mxu0 0.0
    %253 = vmatpush1.msra.mxu0 0.0
    %254 = vmatprep.subr.mxu0 0.0
    %255 = vmatpush1.msra.mxu0 0.0
    %256 = vmatprep.subr.mxu0 0.0
    %257 = vmatpush1.msra.mxu0 0.0
    %258 = vmatprep.subr.mxu0 0.0
    %259 = vmatpush1.msra.mxu0 0.0
    %260 = vmatprep.subr.mxu0 0.0
    %261 = vmatpush1.msra.mxu0 0.0
    %262 = vmatprep.subr.mxu0 0.0
    %263 = vmatpush1.msra.mxu0 0.0
    %264 = vmatprep.subr.mxu0 0.0
    %265 = vmatpush1.msra.mxu0 0.0
    %266 = vmatprep.subr.mxu0 0.0
    %267 = vmatpush1.msra.mxu0 0.0
    %268 = vmatprep.subr.mxu0 0.0
    %269 = vmatpush1.msra.mxu0 0.0
    %270 = vmatprep.subr.mxu0 0.0
    %271 = vmatpush1.msra.mxu0 0.0
    %272 = vmatprep.subr.mxu0 0.0
    %273 = vmatpush1.msra.mxu0 0.0
    %274 = vmatprep.subr.mxu0 0.0
    %275 = vmatpush1.msra.mxu0 0.0
    %276 = vmatprep.subr.mxu0 0.0
    %277 = vmatpush1.msra.mxu0 0.0
    %278 = vmatprep.subr.mxu0 0.0
    %279 = vmatpush1.msra.mxu0 0.0
    %280 = vmatprep.subr.mxu0 0.0
    %281 = vmatpush1.msra.mxu0 0.0
    %282 = vmatprep.subr.mxu0 0.0
    %283 = vmatpush1.msra.mxu0 0.0
    %284 = vmatprep.subr.mxu0 0.0
    %285 = vmatpush1.msra.mxu0 0.0
    %286 = vmatprep.subr.mxu0 0.0
    %287 = vmatpush1.msra.mxu0 0.0
    %288 = vmatprep.subr.mxu0 0.0
    %289 = vmatpush1.msra.mxu0 0.0
    %290 = vmatprep.subr.mxu0 0.0
    %291 = vmatpush1.msra.mxu0 0.0
    %292 = vmatprep.subr.mxu0 0.0
    %293 = vmatpush1.msra.mxu0 0.0
    %294 = vmatprep.subr.mxu0 0.0
    %295 = vmatpush1.msra.mxu0 0.0
    %296 = vmatprep.subr.mxu0 0.0
    %297 = vmatpush1.msra.mxu0 0.0
    %298 = vmatprep.subr.mxu0 0.0
    %299 = vmatpush1.msra.mxu0 0.0
    %300 = vmatprep.subr.mxu0 0.0
    %301 = vmatpush1.msra.mxu0 0.0
    %302 = vmatprep.mubr.f32.mxu0 0.0
    %303 = vmatmul.mubr.f32.gmra.mrb[0].mxu0 %v148
    %v304 = vpop.f32.mrb[0].mxu0
    %v305 = vadd.f32 0.0, %v304
    %v306 = vpop.f32.mrb[0].mxu0
    %v307 = vadd.f32 0.0, %v306
    %308 = vmatprep.mubr.f32.mxu0 0.0
    %309 = vmatmul.mubr.f32.gmra.mrb[0].mxu0 %v150
    %v310 = vpop.f32.mrb[0].mxu0
    %v311 = vadd.f32 0.0, %v310
    %v312 = vpop.f32.mrb[0].mxu0
    %v313 = vadd.f32 0.0, %v312
    %314 = vdwg.mxu0
    %v323 = vcombine.low %v68, %v69
    %v324 = vcombine.low %v70, %v71
    %v326 = vunpack.c.l.s4 1983009808
    %v327 = vunpack.c.0.s8 %v326
    %v328 = vlaneseq
    %v329 = vshrl.u32 %v328, 7
    %v330 = vsub.s32 %v327, %v329
    %v331 = vrot.slane %v323, %v330
    %v333 = vunpack.c.l.s4 1983009808
    %v334 = vunpack.c.0.s8 %v333
    %v335 = vlaneseq
    %v336 = vshrl.u32 %v335, 7
    %v337 = vsub.s32 %v334, %v336
    %v338 = vrot.slane %v324, %v337
    %v339 = vcombine.low %v331, %v338
    %v340 = vcombine.low %v72, %v73
    %v341 = vcombine.low %v74, %v75
    %v343 = vunpack.c.l.s4 1983009808
    %v344 = vunpack.c.0.s8 %v343
    %v345 = vlaneseq
    %v346 = vshrl.u32 %v345, 7
    %v347 = vsub.s32 %v344, %v346
    %v348 = vrot.slane %v340, %v347
    %v350 = vunpack.c.l.s4 1983009808
    %v351 = vunpack.c.0.s8 %v350
    %v352 = vlaneseq
    %v353 = vshrl.u32 %v352, 7
    %v354 = vsub.s32 %v351, %v353
    %v355 = vrot.slane %v341, %v354
    %v356 = vcombine.low %v348, %v355
    %v359 = vcombine.high %v84, %v84
    %v360 = vcombine.high %v85, %v85
    %vm361 = vcmask 31744
    %v362 = vsel %vm361, %v339, 0
    %v364 = vsel %vm361, %v356, 0
    %vm366 = vcmask 1043456
    %v367 = vsel %vm366, %v84, 0
    %v369 = vsel %vm366, %v359, 0
    %v371 = vsel %vm366, %v85, 0
    %v373 = vsel %vm366, %v360, 0
    %375 = vmatprep.subr.mxu0 %v369
    %376 = vmatpush1.msra.mxu0 %v367
    %377 = vmatprep.subr.mxu0 0.0
    %378 = vmatpush1.msra.mxu0 0.0
    %379 = vmatprep.subr.mxu0 0.0
    %380 = vmatpush1.msra.mxu0 0.0
    %381 = vmatprep.subr.mxu0 0.0
    %382 = vmatpush1.msra.mxu0 0.0
    %383 = vmatprep.subr.mxu0 0.0
    %384 = vmatpush1.msra.mxu0 0.0
    %385 = vmatprep.subr.mxu0 0.0
    %386 = vmatpush1.msra.mxu0 0.0
    %387 = vmatprep.subr.mxu0 0.0
    %388 = vmatpush1.msra.mxu0 0.0
    %389 = vmatprep.subr.mxu0 0.0
    %390 = vmatpush1.msra.mxu0 0.0
    %391 = vmatprep.subr.mxu0 0.0
    %392 = vmatpush1.msra.mxu0 0.0
    %393 = vmatprep.subr.mxu0 0.0
    %394 = vmatpush1.msra.mxu0 0.0
    %395 = vmatprep.subr.mxu0 0.0
    %396 = vmatpush1.msra.mxu0 0.0
    %397 = vmatprep.subr.mxu0 0.0
    %398 = vmatpush1.msra.mxu0 0.0
    %399 = vmatprep.subr.mxu0 0.0
    %400 = vmatpush1.msra.mxu0 0.0
    %401 = vmatprep.subr.mxu0 0.0
    %402 = vmatpush1.msra.mxu0 0.0
    %403 = vmatprep.subr.mxu0 0.0
    %404 = vmatpush1.msra.mxu0 0.0
    %405 = vmatprep.subr.mxu0 0.0
    %406 = vmatpush1.msra.mxu0 0.0
    %407 = vmatprep.subr.mxu0 0.0
    %408 = vmatpush1.msra.mxu0 0.0
    %409 = vmatprep.subr.mxu0 0.0
    %410 = vmatpush1.msra.mxu0 0.0
    %411 = vmatprep.subr.mxu0 0.0
    %412 = vmatpush1.msra.mxu0 0.0
    %413 = vmatprep.subr.mxu0 0.0
    %414 = vmatpush1.msra.mxu0 0.0
    %415 = vmatprep.subr.mxu0 0.0
    %416 = vmatpush1.msra.mxu0 0.0
    %417 = vmatprep.subr.mxu0 0.0
    %418 = vmatpush1.msra.mxu0 0.0
    %419 = vmatprep.subr.mxu0 0.0
    %420 = vmatpush1.msra.mxu0 0.0
    %421 = vmatprep.subr.mxu0 0.0
    %422 = vmatpush1.msra.mxu0 0.0
    %423 = vmatprep.subr.mxu0 0.0
    %424 = vmatpush1.msra.mxu0 0.0
    %425 = vmatprep.subr.mxu0 0.0
    %426 = vmatpush1.msra.mxu0 0.0
    %427 = vmatprep.subr.mxu0 0.0
    %428 = vmatpush1.msra.mxu0 0.0
    %429 = vmatprep.subr.mxu0 0.0
    %430 = vmatpush1.msra.mxu0 0.0
    %431 = vmatprep.subr.mxu0 0.0
    %432 = vmatpush1.msra.mxu0 0.0
    %433 = vmatprep.subr.mxu0 0.0
    %434 = vmatpush1.msra.mxu0 0.0
    %435 = vmatprep.subr.mxu0 0.0
    %436 = vmatpush1.msra.mxu0 0.0
    %437 = vmatprep.subr.mxu0 0.0
    %438 = vmatpush1.msra.mxu0 0.0
    %439 = vmatprep.mubr.f32.mxu0 0.0
    %440 = vmatmul.mubr.f32.gmra.mrb[0].mxu0 %v362
    %v441 = vpop.f32.mrb[0].mxu0
    %v442 = vadd.f32 %v228, %v441
    %v443 = vpop.f32.mrb[0].mxu0
    %v444 = vadd.f32 %v230, %v443
    %445 = vmatprep.mubr.f32.mxu0 0.0
    %446 = vmatmul.mubr.f32.gmra.mrb[0].mxu0 %v364
    %v447 = vpop.f32.mrb[0].mxu0
    %v448 = vadd.f32 %v234, %v447
    %v449 = vpop.f32.mrb[0].mxu0
    %v450 = vadd.f32 %v236, %v449
    %451 = vdwg.mxu0
    %452 = vmatprep.subr.mxu0 %v373
    %453 = vmatpush1.msra.mxu0 %v371
    %454 = vmatprep.subr.mxu0 0.0
    %455 = vmatpush1.msra.mxu0 0.0
    %456 = vmatprep.subr.mxu0 0.0
    %457 = vmatpush1.msra.mxu0 0.0
    %458 = vmatprep.subr.mxu0 0.0
    %459 = vmatpush1.msra.mxu0 0.0
    %460 = vmatprep.subr.mxu0 0.0
    %461 = vmatpush1.msra.mxu0 0.0
    %462 = vmatprep.subr.mxu0 0.0
    %463 = vmatpush1.msra.mxu0 0.0
    %464 = vmatprep.subr.mxu0 0.0
    %465 = vmatpush1.msra.mxu0 0.0
    %466 = vmatprep.subr.mxu0 0.0
    %467 = vmatpush1.msra.mxu0 0.0
    %468 = vmatprep.subr.mxu0 0.0
    %469 = vmatpush1.msra.mxu0 0.0
    %470 = vmatprep.subr.mxu0 0.0
    %471 = vmatpush1.msra.mxu0 0.0
    %472 = vmatprep.subr.mxu0 0.0
    %473 = vmatpush1.msra.mxu0 0.0
    %474 = vmatprep.subr.mxu0 0.0
    %475 = vmatpush1.msra.mxu0 0.0
    %476 = vmatprep.subr.mxu0 0.0
    %477 = vmatpush1.msra.mxu0 0.0
    %478 = vmatprep.subr.mxu0 0.0
    %479 = vmatpush1.msra.mxu0 0.0
    %480 = vmatprep.subr.mxu0 0.0
    %481 = vmatpush1.msra.mxu0 0.0
    %482 = vmatprep.subr.mxu0 0.0
    %483 = vmatpush1.msra.mxu0 0.0
    %484 = vmatprep.subr.mxu0 0.0
    %485 = vmatpush1.msra.mxu0 0.0
    %486 = vmatprep.subr.mxu0 0.0
    %487 = vmatpush1.msra.mxu0 0.0
    %488 = vmatprep.subr.mxu0 0.0
    %489 = vmatpush1.msra.mxu0 0.0
    %490 = vmatprep.subr.mxu0 0.0
    %491 = vmatpush1.msra.mxu0 0.0
    %492 = vmatprep.subr.mxu0 0.0
    %493 = vmatpush1.msra.mxu0 0.0
    %494 = vmatprep.subr.mxu0 0.0
    %495 = vmatpush1.msra.mxu0 0.0
    %496 = vmatprep.subr.mxu0 0.0
    %497 = vmatpush1.msra.mxu0 0.0
    %498 = vmatprep.subr.mxu0 0.0
    %499 = vmatpush1.msra.mxu0 0.0
    %500 = vmatprep.subr.mxu0 0.0
    %501 = vmatpush1.msra.mxu0 0.0
    %502 = vmatprep.subr.mxu0 0.0
    %503 = vmatpush1.msra.mxu0 0.0
    %504 = vmatprep.subr.mxu0 0.0
    %505 = vmatpush1.msra.mxu0 0.0
    %506 = vmatprep.subr.mxu0 0.0
    %507 = vmatpush1.msra.mxu0 0.0
    %508 = vmatprep.subr.mxu0 0.0
    %509 = vmatpush1.msra.mxu0 0.0
    %510 = vmatprep.subr.mxu0 0.0
    %511 = vmatpush1.msra.mxu0 0.0
    %512 = vmatprep.subr.mxu0 0.0
    %513 = vmatpush1.msra.mxu0 0.0
    %514 = vmatprep.subr.mxu0 0.0
    %515 = vmatpush1.msra.mxu0 0.0
    %516 = vmatprep.mubr.f32.mxu0 0.0
    %517 = vmatmul.mubr.f32.gmra.mrb[0].mxu0 %v362
    %v518 = vpop.f32.mrb[0].mxu0
    %v519 = vadd.f32 %v305, %v518
    %v520 = vpop.f32.mrb[0].mxu0
    %v521 = vadd.f32 %v307, %v520
    %522 = vmatprep.mubr.f32.mxu0 0.0
    %523 = vmatmul.mubr.f32.gmra.mrb[0].mxu0 %v364
    %v524 = vpop.f32.mrb[0].mxu0
    %v525 = vadd.f32 %v311, %v524
    %v526 = vpop.f32.mrb[0].mxu0
    %v527 = vadd.f32 %v313, %v526
    %528 = vdwg.mxu0
    %v529 = vld [vmem:[%s7] sm:$0xf]
    %v531 = vlaneseq
    %v532 = vshrl.u32 %v531, 7
    %v533 = vsub.s32 0, %v532
    %v534 = vrot.slane %v529, %v533
    %v535 = vlaneseq
    %v536 = vshrl.u32 %v535, 7
    %v537 = vsub.s32 1, %v536
    %v538 = vrot.slane %v529, %v537
    %v539 = vlaneseq
    %v540 = vshrl.u32 %v539, 7
    %v541 = vsub.s32 2, %v540
    %v542 = vrot.slane %v529, %v541
    %v543 = vlaneseq
    %v544 = vshrl.u32 %v543, 7
    %v545 = vsub.s32 3, %v544
    %v546 = vrot.slane %v529, %v545
    %v551 = vadd.f32 %v442, %v534
    %v552 = vadd.f32 %v444, %v538
    %v553 = vadd.f32 %v519, %v542
    %v554 = vadd.f32 %v521, %v546
    %v555 = vadd.f32 %v448, %v534
    %v556 = vadd.f32 %v450, %v538
    %v557 = vadd.f32 %v525, %v542
    %v558 = vadd.f32 %v527, %v546
    %v567 = vcombine.low %v551, %v552
    %v568 = vcombine.high %v551, %v552
    %v569 = vcombine.low %v553, %v554
    %v570 = vcombine.high %v553, %v554
    %v572 = vunpack.c.l.s4 1983009808
    %v573 = vunpack.c.0.s8 %v572
    %v574 = vlaneseq
    %v575 = vshrl.u32 %v574, 7
    %v576 = vsub.s32 %v573, %v575
    %v577 = vrot.slane %v567, %v576
    %v579 = vunpack.c.l.s4 1983009808
    %v580 = vunpack.c.0.s8 %v579
    %v581 = vlaneseq
    %v582 = vshrl.u32 %v581, 7
    %v583 = vsub.s32 %v580, %v582
    %v584 = vrot.slane %v568, %v583
    %v586 = vunpack.c.l.s4 1983009808
    %v587 = vunpack.c.0.s8 %v586
    %v588 = vlaneseq
    %v589 = vshrl.u32 %v588, 7
    %v590 = vsub.s32 %v587, %v589
    %v591 = vrot.slane %v569, %v590
    %v593 = vunpack.c.l.s4 1983009808
    %v594 = vunpack.c.0.s8 %v593
    %v595 = vlaneseq
    %v596 = vshrl.u32 %v595, 7
    %v597 = vsub.s32 %v594, %v596
    %v598 = vrot.slane %v570, %v597
    %v599 = vcombine.low %v577, %v591
    %v600 = vcombine.high %v577, %v591
    %v601 = vcombine.low %v584, %v598
    %v602 = vcombine.high %v584, %v598
    %v603 = vcombine.low %v555, %v556
    %v604 = vcombine.high %v555, %v556
    %v605 = vcombine.low %v557, %v558
    %v606 = vcombine.high %v557, %v558
    %v608 = vunpack.c.l.s4 1983009808
    %v609 = vunpack.c.0.s8 %v608
    %v610 = vlaneseq
    %v611 = vshrl.u32 %v610, 7
    %v612 = vsub.s32 %v609, %v611
    %v613 = vrot.slane %v603, %v612
    %v615 = vunpack.c.l.s4 1983009808
    %v616 = vunpack.c.0.s8 %v615
    %v617 = vlaneseq
    %v618 = vshrl.u32 %v617, 7
    %v619 = vsub.s32 %v616, %v618
    %v620 = vrot.slane %v604, %v619
    %v622 = vunpack.c.l.s4 1983009808
    %v623 = vunpack.c.0.s8 %v622
    %v624 = vlaneseq
    %v625 = vshrl.u32 %v624, 7
    %v626 = vsub.s32 %v623, %v625
    %v627 = vrot.slane %v605, %v626
    %v629 = vunpack.c.l.s4 1983009808
    %v630 = vunpack.c.0.s8 %v629
    %v631 = vlaneseq
    %v632 = vshrl.u32 %v631, 7
    %v633 = vsub.s32 %v630, %v632
    %v634 = vrot.slane %v606, %v633
    %v635 = vcombine.low %v613, %v627
    %v636 = vcombine.high %v613, %v627
    %v637 = vcombine.low %v620, %v634
    %v638 = vcombine.high %v620, %v634
    %647 = vst [vmem:[#allocation2] sm:$0xff] %v599
    %648 = vst [vmem:[#allocation2 + $0x8] sm:$0xff] %v600
    %649 = vst [vmem:[#allocation2 + $0x10] sm:$0xff] %v601
    %650 = vst [vmem:[#allocation2 + $0x18] sm:$0xff] %v602
    %651 = vst [vmem:[#allocation2 + $0x20] sm:$0xff] %v635
    %652 = vst [vmem:[#allocation2 + $0x28] sm:$0xff] %v636
    %653 = vst [vmem:[#allocation2 + $0x30] sm:$0xff] %v637
    %654 = vst [vmem:[#allocation2 + $0x38] sm:$0xff] %v638
    %v655 = vld [vmem:[%s2] sm:$0x3]
    %vm656 = vcmask 523264
    %v657 = vsel %vm656, %v655, 0.0
    %v658 = vld [vmem:[%s3] sm:$0x3]
    %v659 = vsel %vm656, %v658, 0.0
    %v660 = vld [vmem:[#allocation2] sm:$0xff]
    %v661 = vld [vmem:[#allocation3] sm:$0xff]
    %v662 = vld [vmem:[#allocation3 + $0x8] sm:$0xff]
    %v663 = vld [vmem:[#allocation3 + $0x10] sm:$0xff]
    %v664 = vld [vmem:[#allocation3 + $0x18] sm:$0xff]
    %v665 = vld [vmem:[#allocation3 + $0x20] sm:$0xff]
    %v666 = vld [vmem:[#allocation3 + $0x28] sm:$0xff]
    %v667 = vld [vmem:[#allocation3 + $0x30] sm:$0xff]
    %v668 = vld [vmem:[#allocation3 + $0x38] sm:$0xff]
    %v669 = vld [vmem:[#allocation3 + $0x40] sm:$0xff]
    %v670 = vld [vmem:[#allocation3 + $0x48] sm:$0xff]
    %v671 = vld [vmem:[#allocation3 + $0x50] sm:$0xff]
    %v672 = vld [vmem:[#allocation3 + $0x58] sm:$0xff]
    %v673 = vld [vmem:[#allocation3 + $0x60] sm:$0xff]
    %v674 = vld [vmem:[#allocation3 + $0x68] sm:$0xff]
    %v675 = vld [vmem:[#allocation3 + $0x70] sm:$0xff]
    %v676 = vld [vmem:[#allocation3 + $0x78] sm:$0xff]
    %v677 = vld [vmem:[#allocation3 + $0x80] sm:$0xff]
    %v678 = vld [vmem:[#allocation3 + $0x88] sm:$0xff]
    %v679 = vld [vmem:[#allocation3 + $0x90] sm:$0xff]
    %v680 = vld [vmem:[#allocation3 + $0x98] sm:$0xff]
    %v681 = vld [vmem:[#allocation3 + $0xa0] sm:$0xff]
    %v682 = vld [vmem:[#allocation3 + $0xa8] sm:$0xff]
    %v683 = vld [vmem:[#allocation3 + $0xb0] sm:$0xff]
    %v684 = vld [vmem:[#allocation3 + $0xb8] sm:$0xff]
    %v685 = vld [vmem:[#allocation3 + $0xc0] sm:$0xff]
    %v686 = vld [vmem:[#allocation3 + $0xc8] sm:$0xff]
    %v687 = vld [vmem:[#allocation3 + $0xd0] sm:$0xff]
    %v688 = vld [vmem:[#allocation3 + $0xd8] sm:$0xff]
    %v689 = vld [vmem:[#allocation3 + $0xe0] sm:$0xff]
    %v690 = vld [vmem:[#allocation3 + $0xe8] sm:$0xff]
    %v691 = vld [vmem:[#allocation3 + $0xf0] sm:$0xff]
    %v692 = vld [vmem:[#allocation3 + $0xf8] sm:$0xff]
    %v693 = vld [vmem:[#allocation3 + $0x100] sm:$0xff]
    %v694 = vld [vmem:[#allocation3 + $0x108] sm:$0xff]
    %v695 = vld [vmem:[#allocation3 + $0x110] sm:$0xff]
    %v696 = vld [vmem:[#allocation3 + $0x118] sm:$0xff]
    %v697 = vld [vmem:[#allocation3 + $0x120] sm:$0xff]
    %v698 = vld [vmem:[#allocation3 + $0x128] sm:$0xff]
    %v699 = vld [vmem:[#allocation3 + $0x130] sm:$0xff]
    %v700 = vld [vmem:[#allocation3 + $0x138] sm:$0xff]
    %v701 = vld [vmem:[#allocation3 + $0x140] sm:$0xff]
    %v702 = vld [vmem:[#allocation3 + $0x148] sm:$0xff]
    %v703 = vld [vmem:[#allocation3 + $0x150] sm:$0xff]
    %v704 = vld [vmem:[#allocation3 + $0x158] sm:$0xff]
    %v705 = vld [vmem:[#allocation3 + $0x160] sm:$0xff]
    %v706 = vld [vmem:[#allocation3 + $0x168] sm:$0xff]
    %v707 = vld [vmem:[#allocation3 + $0x170] sm:$0xff]
    %v708 = vld [vmem:[#allocation3 + $0x178] sm:$0xff]
    %v709 = vld [vmem:[#allocation3 + $0x180] sm:$0xff]
    %v710 = vld [vmem:[#allocation3 + $0x188] sm:$0xff]
    %v711 = vld [vmem:[#allocation3 + $0x190] sm:$0xff]
    %v712 = vld [vmem:[#allocation3 + $0x198] sm:$0xff]
    %v713 = vld [vmem:[#allocation3 + $0x1a0] sm:$0xff]
    %v714 = vld [vmem:[#allocation3 + $0x1a8] sm:$0xff]
    %v715 = vld [vmem:[#allocation3 + $0x1b0] sm:$0xff]
    %v716 = vld [vmem:[#allocation3 + $0x1b8] sm:$0xff]
    %v717 = vld [vmem:[#allocation3 + $0x1c0] sm:$0xff]
    %v718 = vld [vmem:[#allocation3 + $0x1c8] sm:$0xff]
    %v719 = vld [vmem:[#allocation3 + $0x1d0] sm:$0xff]
    %v720 = vld [vmem:[#allocation3 + $0x1d8] sm:$0xff]
    %v721 = vld [vmem:[#allocation3 + $0x1e0] sm:$0xff]
    %v722 = vld [vmem:[#allocation3 + $0x1e8] sm:$0xff]
    %v723 = vld [vmem:[#allocation3 + $0x1f0] sm:$0xff]
    %v724 = vld [vmem:[#allocation3 + $0x1f8] sm:$0xff]
    %725 = vmatprep.subr.mxu0 %v662
    %726 = vmatpush1.msra.mxu0 %v661
    %727 = vmatprep.subr.mxu0 %v666
    %728 = vmatpush1.msra.mxu0 %v665
    %729 = vmatprep.subr.mxu0 %v670
    %730 = vmatpush1.msra.mxu0 %v669
    %731 = vmatprep.subr.mxu0 %v674
    %732 = vmatpush1.msra.mxu0 %v673
    %733 = vmatprep.subr.mxu0 %v678
    %734 = vmatpush1.msra.mxu0 %v677
    %735 = vmatprep.subr.mxu0 %v682
    %736 = vmatpush1.msra.mxu0 %v681
    %737 = vmatprep.subr.mxu0 %v686
    %738 = vmatpush1.msra.mxu0 %v685
    %739 = vmatprep.subr.mxu0 %v690
    %740 = vmatpush1.msra.mxu0 %v689
    %741 = vmatprep.subr.mxu0 %v694
    %742 = vmatpush1.msra.mxu0 %v693
    %743 = vmatprep.subr.mxu0 %v698
    %744 = vmatpush1.msra.mxu0 %v697
    %745 = vmatprep.subr.mxu0 %v702
    %746 = vmatpush1.msra.mxu0 %v701
    %747 = vmatprep.subr.mxu0 %v706
    %748 = vmatpush1.msra.mxu0 %v705
    %749 = vmatprep.subr.mxu0 %v710
    %750 = vmatpush1.msra.mxu0 %v709
    %751 = vmatprep.subr.mxu0 %v714
    %752 = vmatpush1.msra.mxu0 %v713
    %753 = vmatprep.subr.mxu0 %v718
    %754 = vmatpush1.msra.mxu0 %v717
    %755 = vmatprep.subr.mxu0 %v722
    %756 = vmatpush1.msra.mxu0 %v721
    %757 = vmatprep.subr.mxu0 0.0
    %758 = vmatpush1.msra.mxu0 0.0
    %759 = vmatprep.subr.mxu0 0.0
    %760 = vmatpush1.msra.mxu0 0.0
    %761 = vmatprep.subr.mxu0 0.0
    %762 = vmatpush1.msra.mxu0 0.0
    %763 = vmatprep.subr.mxu0 0.0
    %764 = vmatpush1.msra.mxu0 0.0
    %765 = vmatprep.subr.mxu0 0.0
    %766 = vmatpush1.msra.mxu0 0.0
    %767 = vmatprep.subr.mxu0 0.0
    %768 = vmatpush1.msra.mxu0 0.0
    %769 = vmatprep.subr.mxu0 0.0
    %770 = vmatpush1.msra.mxu0 0.0
    %771 = vmatprep.subr.mxu0 0.0
    %772 = vmatpush1.msra.mxu0 0.0
    %773 = vmatprep.subr.mxu0 0.0
    %774 = vmatpush1.msra.mxu0 0.0
    %775 = vmatprep.subr.mxu0 0.0
    %776 = vmatpush1.msra.mxu0 0.0
    %777 = vmatprep.subr.mxu0 0.0
    %778 = vmatpush1.msra.mxu0 0.0
    %779 = vmatprep.subr.mxu0 0.0
    %780 = vmatpush1.msra.mxu0 0.0
    %781 = vmatprep.subr.mxu0 0.0
    %782 = vmatpush1.msra.mxu0 0.0
    %783 = vmatprep.subr.mxu0 0.0
    %784 = vmatpush1.msra.mxu0 0.0
    %785 = vmatprep.subr.mxu0 0.0
    %786 = vmatpush1.msra.mxu0 0.0
    %787 = vmatprep.subr.mxu0 0.0
    %788 = vmatpush1.msra.mxu0 0.0
    %789 = vmatprep.mubr.f32.mxu0 0.0
    %790 = vmatmul.mubr.f32.gmra.mrb[0].mxu0 %v657
    %v791 = vpop.f32.mrb[0].mxu0
    %v792 = vadd.f32 0.0, %v791
    %v793 = vpop.f32.mrb[0].mxu0
    %v794 = vadd.f32 0.0, %v793
    %795 = vdwg.mxu0
    %796 = vmatprep.subr.mxu0 %v664
    %797 = vmatpush1.msra.mxu0 %v663
    %798 = vmatprep.subr.mxu0 %v668
    %799 = vmatpush1.msra.mxu0 %v667
    %800 = vmatprep.subr.mxu0 %v672
    %801 = vmatpush1.msra.mxu0 %v671
    %802 = vmatprep.subr.mxu0 %v676
    %803 = vmatpush1.msra.mxu0 %v675
    %804 = vmatprep.subr.mxu0 %v680
    %805 = vmatpush1.msra.mxu0 %v679
    %806 = vmatprep.subr.mxu0 %v684
    %807 = vmatpush1.msra.mxu0 %v683
    %808 = vmatprep.subr.mxu0 %v688
    %809 = vmatpush1.msra.mxu0 %v687
    %810 = vmatprep.subr.mxu0 %v692
    %811 = vmatpush1.msra.mxu0 %v691
    %812 = vmatprep.subr.mxu0 %v696
    %813 = vmatpush1.msra.mxu0 %v695
    %814 = vmatprep.subr.mxu0 %v700
    %815 = vmatpush1.msra.mxu0 %v699
    %816 = vmatprep.subr.mxu0 %v704
    %817 = vmatpush1.msra.mxu0 %v703
    %818 = vmatprep.subr.mxu0 %v708
    %819 = vmatpush1.msra.mxu0 %v707
    %820 = vmatprep.subr.mxu0 %v712
    %821 = vmatpush1.msra.mxu0 %v711
    %822 = vmatprep.subr.mxu0 %v716
    %823 = vmatpush1.msra.mxu0 %v715
    %824 = vmatprep.subr.mxu0 %v720
    %825 = vmatpush1.msra.mxu0 %v719
    %826 = vmatprep.subr.mxu0 %v724
    %827 = vmatpush1.msra.mxu0 %v723
    %828 = vmatprep.subr.mxu0 0.0
    %829 = vmatpush1.msra.mxu0 0.0
    %830 = vmatprep.subr.mxu0 0.0
    %831 = vmatpush1.msra.mxu0 0.0
    %832 = vmatprep.subr.mxu0 0.0
    %833 = vmatpush1.msra.mxu0 0.0
    %834 = vmatprep.subr.mxu0 0.0
    %835 = vmatpush1.msra.mxu0 0.0
    %836 = vmatprep.subr.mxu0 0.0
    %837 = vmatpush1.msra.mxu0 0.0
    %838 = vmatprep.subr.mxu0 0.0
    %839 = vmatpush1.msra.mxu0 0.0
    %840 = vmatprep.subr.mxu0 0.0
    %841 = vmatpush1.msra.mxu0 0.0
    %842 = vmatprep.subr.mxu0 0.0
    %843 = vmatpush1.msra.mxu0 0.0
    %844 = vmatprep.subr.mxu0 0.0
    %845 = vmatpush1.msra.mxu0 0.0
    %846 = vmatprep.subr.mxu0 0.0
    %847 = vmatpush1.msra.mxu0 0.0
    %848 = vmatprep.subr.mxu0 0.0
    %849 = vmatpush1.msra.mxu0 0.0
    %850 = vmatprep.subr.mxu0 0.0
    %851 = vmatpush1.msra.mxu0 0.0
    %852 = vmatprep.subr.mxu0 0.0
    %853 = vmatpush1.msra.mxu0 0.0
    %854 = vmatprep.subr.mxu0 0.0
    %855 = vmatpush1.msra.mxu0 0.0
    %856 = vmatprep.subr.mxu0 0.0
    %857 = vmatpush1.msra.mxu0 0.0
    %858 = vmatprep.subr.mxu0 0.0
    %859 = vmatpush1.msra.mxu0 0.0
    %860 = vmatprep.mubr.f32.mxu0 0.0
    %861 = vmatmul.mubr.f32.gmra.mrb[0].mxu0 %v657
    %v862 = vpop.f32.mrb[0].mxu0
    %v863 = vadd.f32 0.0, %v862
    %v864 = vpop.f32.mrb[0].mxu0
    %v865 = vadd.f32 0.0, %v864
    %866 = vdwg.mxu0
    %v871 = vcombine.low %v792, %v794
    %v872 = vcombine.low %v863, %v865
    %v874 = vunpack.c.l.s4 1983009808
    %v875 = vunpack.c.0.s8 %v874
    %v876 = vlaneseq
    %v877 = vshrl.u32 %v876, 7
    %v878 = vsub.s32 %v875, %v877
    %v879 = vrot.slane %v871, %v878
    %v881 = vunpack.c.l.s4 1983009808
    %v882 = vunpack.c.0.s8 %v881
    %v883 = vlaneseq
    %v884 = vshrl.u32 %v883, 7
    %v885 = vsub.s32 %v882, %v884
    %v886 = vrot.slane %v872, %v885
    %v887 = vcombine.low %v879, %v886
    %v889 = vadd.f32 %v660, %v887
    %v890 = vxor.u32 %v889, 2147483648
    %v891 = vmul.f32 %v890, 1.442695
    %v892 = vpow.pop %v891
    %v893 = vadd.f32 %v892, 1.0
    %v894 = vrcp.pop %v893
    %v895 = vmul.f32 1.0, %v894
    %v897 = vrot.slane %v889, 2
    %v899 = vxor.u32 %v897, 2147483648
    %v900 = vmul.f32 %v899, 1.442695
    %v901 = vpow.pop %v900
    %v902 = vadd.f32 %v901, 1.0
    %v903 = vrcp.pop %v902
    %v904 = vmul.f32 1.0, %v903
    %v905 = vrot.slane %v889, 4
    %v907 = vtanh.pop %v905
    %v908 = vrot.slane %v889, 6
    %v910 = vxor.u32 %v908, 2147483648
    %v911 = vmul.f32 %v910, 1.442695
    %v912 = vpow.pop %v911
    %v913 = vadd.f32 %v912, 1.0
    %v914 = vrcp.pop %v913
    %v915 = vmul.f32 1.0, %v914
    %v916 = vmul.f32 %v904, %v659
    %v917 = vmul.f32 %v895, %v907
    %v918 = vadd.f32 %v916, %v917
    %v919 = vtanh.pop %v918
    %v920 = vmul.f32 %v915, %v919
    %s921 = scalar_lea.vmem [#allocation2], 8
    %v922 = vld [vmem:[%s921] sm:$0xff]
    %923 = vmatprep.subr.mxu0 %v662
    %924 = vmatpush1.msra.mxu0 %v661
    %925 = vmatprep.subr.mxu0 %v666
    %926 = vmatpush1.msra.mxu0 %v665
    %927 = vmatprep.subr.mxu0 %v670
    %928 = vmatpush1.msra.mxu0 %v669
    %929 = vmatprep.subr.mxu0 %v674
    %930 = vmatpush1.msra.mxu0 %v673
    %931 = vmatprep.subr.mxu0 %v678
    %932 = vmatpush1.msra.mxu0 %v677
    %933 = vmatprep.subr.mxu0 %v682
    %934 = vmatpush1.msra.mxu0 %v681
    %935 = vmatprep.subr.mxu0 %v686
    %936 = vmatpush1.msra.mxu0 %v685
    %937 = vmatprep.subr.mxu0 %v690
    %938 = vmatpush1.msra.mxu0 %v689
    %939 = vmatprep.subr.mxu0 %v694
    %940 = vmatpush1.msra.mxu0 %v693
    %941 = vmatprep.subr.mxu0 %v698
    %942 = vmatpush1.msra.mxu0 %v697
    %943 = vmatprep.subr.mxu0 %v702
    %944 = vmatpush1.msra.mxu0 %v701
    %945 = vmatprep.subr.mxu0 %v706
    %946 = vmatpush1.msra.mxu0 %v705
    %947 = vmatprep.subr.mxu0 %v710
    %948 = vmatpush1.msra.mxu0 %v709
    %949 = vmatprep.subr.mxu0 %v714
    %950 = vmatpush1.msra.mxu0 %v713
    %951 = vmatprep.subr.mxu0 %v718
    %952 = vmatpush1.msra.mxu0 %v717
    %953 = vmatprep.subr.mxu0 %v722
    %954 = vmatpush1.msra.mxu0 %v721
    %955 = vmatprep.subr.mxu0 0.0
    %956 = vmatpush1.msra.mxu0 0.0
    %957 = vmatprep.subr.mxu0 0.0
    %958 = vmatpush1.msra.mxu0 0.0
    %959 = vmatprep.subr.mxu0 0.0
    %960 = vmatpush1.msra.mxu0 0.0
    %961 = vmatprep.subr.mxu0 0.0
    %962 = vmatpush1.msra.mxu0 0.0
    %963 = vmatprep.subr.mxu0 0.0
    %964 = vmatpush1.msra.mxu0 0.0
    %965 = vmatprep.subr.mxu0 0.0
    %966 = vmatpush1.msra.mxu0 0.0
    %967 = vmatprep.subr.mxu0 0.0
    %968 = vmatpush1.msra.mxu0 0.0
    %969 = vmatprep.subr.mxu0 0.0
    %970 = vmatpush1.msra.mxu0 0.0
    %971 = vmatprep.subr.mxu0 0.0
    %972 = vmatpush1.msra.mxu0 0.0
    %973 = vmatprep.subr.mxu0 0.0
    %974 = vmatpush1.msra.mxu0 0.0
    %975 = vmatprep.subr.mxu0 0.0
    %976 = vmatpush1.msra.mxu0 0.0
    %977 = vmatprep.subr.mxu0 0.0
    %978 = vmatpush1.msra.mxu0 0.0
    %979 = vmatprep.subr.mxu0 0.0
    %980 = vmatpush1.msra.mxu0 0.0
    %981 = vmatprep.subr.mxu0 0.0
    %982 = vmatpush1.msra.mxu0 0.0
    %983 = vmatprep.subr.mxu0 0.0
    %984 = vmatpush1.msra.mxu0 0.0
    %985 = vmatprep.subr.mxu0 0.0
    %986 = vmatpush1.msra.mxu0 0.0
    %987 = vmatprep.mubr.f32.mxu0 0.0
    %988 = vmatmul.mubr.f32.gmra.mrb[0].mxu0 %v920
    %v989 = vpop.f32.mrb[0].mxu0
    %v990 = vadd.f32 0.0, %v989
    %v991 = vpop.f32.mrb[0].mxu0
    %v992 = vadd.f32 0.0, %v991
    %993 = vdwg.mxu0
    %994 = vmatprep.subr.mxu0 %v664
    %995 = vmatpush1.msra.mxu0 %v663
    %996 = vmatprep.subr.mxu0 %v668
    %997 = vmatpush1.msra.mxu0 %v667
    %998 = vmatprep.subr.mxu0 %v672
    %999 = vmatpush1.msra.mxu0 %v671
    %1000 = vmatprep.subr.mxu0 %v676
    %1001 = vmatpush1.msra.mxu0 %v675
    %1002 = vmatprep.subr.mxu0 %v680
    %1003 = vmatpush1.msra.mxu0 %v679
    %1004 = vmatprep.subr.mxu0 %v684
    %1005 = vmatpush1.msra.mxu0 %v683
    %1006 = vmatprep.subr.mxu0 %v688
    %1007 = vmatpush1.msra.mxu0 %v687
    %1008 = vmatprep.subr.mxu0 %v692
    %1009 = vmatpush1.msra.mxu0 %v691
    %1010 = vmatprep.subr.mxu0 %v696
    %1011 = vmatpush1.msra.mxu0 %v695
    %1012 = vmatprep.subr.mxu0 %v700
    %1013 = vmatpush1.msra.mxu0 %v699
    %1014 = vmatprep.subr.mxu0 %v704
    %1015 = vmatpush1.msra.mxu0 %v703
    %1016 = vmatprep.subr.mxu0 %v708
    %1017 = vmatpush1.msra.mxu0 %v707
    %1018 = vmatprep.subr.mxu0 %v712
    %1019 = vmatpush1.msra.mxu0 %v711
    %1020 = vmatprep.subr.mxu0 %v716
    %1021 = vmatpush1.msra.mxu0 %v715
    %1022 = vmatprep.subr.mxu0 %v720
    %1023 = vmatpush1.msra.mxu0 %v719
    %1024 = vmatprep.subr.mxu0 %v724
    %1025 = vmatpush1.msra.mxu0 %v723
    %1026 = vmatprep.subr.mxu0 0.0
    %1027 = vmatpush1.msra.mxu0 0.0
    %1028 = vmatprep.subr.mxu0 0.0
    %1029 = vmatpush1.msra.mxu0 0.0
    %1030 = vmatprep.subr.mxu0 0.0
    %1031 = vmatpush1.msra.mxu0 0.0
    %1032 = vmatprep.subr.mxu0 0.0
    %1033 = vmatpush1.msra.mxu0 0.0
    %1034 = vmatprep.subr.mxu0 0.0
    %1035 = vmatpush1.msra.mxu0 0.0
    %1036 = vmatprep.subr.mxu0 0.0
    %1037 = vmatpush1.msra.mxu0 0.0
    %1038 = vmatprep.subr.mxu0 0.0
    %1039 = vmatpush1.msra.mxu0 0.0
    %1040 = vmatprep.subr.mxu0 0.0
    %1041 = vmatpush1.msra.mxu0 0.0
    %1042 = vmatprep.subr.mxu0 0.0
    %1043 = vmatpush1.msra.mxu0 0.0
    %1044 = vmatprep.subr.mxu0 0.0
    %1045 = vmatpush1.msra.mxu0 0.0
    %1046 = vmatprep.subr.mxu0 0.0
    %1047 = vmatpush1.msra.mxu0 0.0
    %1048 = vmatprep.subr.mxu0 0.0
    %1049 = vmatpush1.msra.mxu0 0.0
    %1050 = vmatprep.subr.mxu0 0.0
    %1051 = vmatpush1.msra.mxu0 0.0
    %1052 = vmatprep.subr.mxu0 0.0
    %1053 = vmatpush1.msra.mxu0 0.0
    %1054 = vmatprep.subr.mxu0 0.0
    %1055 = vmatpush1.msra.mxu0 0.0
    %1056 = vmatprep.subr.mxu0 0.0
    %1057 = vmatpush1.msra.mxu0 0.0
    %1058 = vmatprep.mubr.f32.mxu0 0.0
    %1059 = vmatmul.mubr.f32.gmra.mrb[0].mxu0 %v920
    %v1060 = vpop.f32.mrb[0].mxu0
    %v1061 = vadd.f32 0.0, %v1060
    %v1062 = vpop.f32.mrb[0].mxu0
    %v1063 = vadd.f32 0.0, %v1062
    %1064 = vdwg.mxu0
    %v1069 = vcombine.low %v990, %v992
    %v1070 = vcombine.low %v1061, %v1063
    %v1072 = vunpack.c.l.s4 1983009808
    %v1073 = vunpack.c.0.s8 %v1072
    %v1074 = vlaneseq
    %v1075 = vshrl.u32 %v1074, 7
    %v1076 = vsub.s32 %v1073, %v1075
    %v1077 = vrot.slane %v1069, %v1076
    %v1079 = vunpack.c.l.s4 1983009808
    %v1080 = vunpack.c.0.s8 %v1079
    %v1081 = vlaneseq
    %v1082 = vshrl.u32 %v1081, 7
    %v1083 = vsub.s32 %v1080, %v1082
    %v1084 = vrot.slane %v1070, %v1083
    %v1085 = vcombine.low %v1077, %v1084
    %v1087 = vadd.f32 %v922, %v1085
    %v1088 = vxor.u32 %v1087, 2147483648
    %v1089 = vmul.f32 %v1088, 1.442695
    %v1090 = vpow.pop %v1089
    %v1091 = vadd.f32 %v1090, 1.0
    %v1092 = vrcp.pop %v1091
    %v1093 = vmul.f32 1.0, %v1092
    %v1095 = vrot.slane %v1087, 2
    %v1097 = vxor.u32 %v1095, 2147483648
    %v1098 = vmul.f32 %v1097, 1.442695
    %v1099 = vpow.pop %v1098
    %v1100 = vadd.f32 %v1099, 1.0
    %v1101 = vrcp.pop %v1100
    %v1102 = vmul.f32 1.0, %v1101
    %v1103 = vrot.slane %v1087, 4
    %v1105 = vtanh.pop %v1103
    %v1106 = vrot.slane %v1087, 6
    %v1108 = vxor.u32 %v1106, 2147483648
    %v1109 = vmul.f32 %v1108, 1.442695
    %v1110 = vpow.pop %v1109
    %v1111 = vadd.f32 %v1110, 1.0
    %v1112 = vrcp.pop %v1111
    %v1113 = vmul.f32 1.0, %v1112
    %v1114 = vmul.f32 %v1102, %v918
    %v1115 = vmul.f32 %v1093, %v1105
    %v1116 = vadd.f32 %v1114, %v1115
    %v1117 = vtanh.pop %v1116
    %v1118 = vmul.f32 %v1113, %v1117
    %s1119 = scalar_lea.vmem [#allocation2], 16
    %v1120 = vld [vmem:[%s1119] sm:$0xff]
    %1121 = vmatprep.subr.mxu0 %v662
    %1122 = vmatpush1.msra.mxu0 %v661
    %1123 = vmatprep.subr.mxu0 %v666
    %1124 = vmatpush1.msra.mxu0 %v665
    %1125 = vmatprep.subr.mxu0 %v670
    %1126 = vmatpush1.msra.mxu0 %v669
    %1127 = vmatprep.subr.mxu0 %v674
    %1128 = vmatpush1.msra.mxu0 %v673
    %1129 = vmatprep.subr.mxu0 %v678
    %1130 = vmatpush1.msra.mxu0 %v677
    %1131 = vmatprep.subr.mxu0 %v682
    %1132 = vmatpush1.msra.mxu0 %v681
    %1133 = vmatprep.subr.mxu0 %v686
    %1134 = vmatpush1.msra.mxu0 %v685
    %1135 = vmatprep.subr.mxu0 %v690
    %1136 = vmatpush1.msra.mxu0 %v689
    %1137 = vmatprep.subr.mxu0 %v694
    %1138 = vmatpush1.msra.mxu0 %v693
    %1139 = vmatprep.subr.mxu0 %v698
    %1140 = vmatpush1.msra.mxu0 %v697
    %1141 = vmatprep.subr.mxu0 %v702
    %1142 = vmatpush1.msra.mxu0 %v701
    %1143 = vmatprep.subr.mxu0 %v706
    %1144 = vmatpush1.msra.mxu0 %v705
    %1145 = vmatprep.subr.mxu0 %v710
    %1146 = vmatpush1.msra.mxu0 %v709
    %1147 = vmatprep.subr.mxu0 %v714
    %1148 = vmatpush1.msra.mxu0 %v713
    %1149 = vmatprep.subr.mxu0 %v718
    %1150 = vmatpush1.msra.mxu0 %v717
    %1151 = vmatprep.subr.mxu0 %v722
    %1152 = vmatpush1.msra.mxu0 %v721
    %1153 = vmatprep.subr.mxu0 0.0
    %1154 = vmatpush1.msra.mxu0 0.0
    %1155 = vmatprep.subr.mxu0 0.0
    %1156 = vmatpush1.msra.mxu0 0.0
    %1157 = vmatprep.subr.mxu0 0.0
    %1158 = vmatpush1.msra.mxu0 0.0
    %1159 = vmatprep.subr.mxu0 0.0
    %1160 = vmatpush1.msra.mxu0 0.0
    %1161 = vmatprep.subr.mxu0 0.0
    %1162 = vmatpush1.msra.mxu0 0.0
    %1163 = vmatprep.subr.mxu0 0.0
    %1164 = vmatpush1.msra.mxu0 0.0
    %1165 = vmatprep.subr.mxu0 0.0
    %1166 = vmatpush1.msra.mxu0 0.0
    %1167 = vmatprep.subr.mxu0 0.0
    %1168 = vmatpush1.msra.mxu0 0.0
    %1169 = vmatprep.subr.mxu0 0.0
    %1170 = vmatpush1.msra.mxu0 0.0
    %1171 = vmatprep.subr.mxu0 0.0
    %1172 = vmatpush1.msra.mxu0 0.0
    %1173 = vmatprep.subr.mxu0 0.0
    %1174 = vmatpush1.msra.mxu0 0.0
    %1175 = vmatprep.subr.mxu0 0.0
    %1176 = vmatpush1.msra.mxu0 0.0
    %1177 = vmatprep.subr.mxu0 0.0
    %1178 = vmatpush1.msra.mxu0 0.0
    %1179 = vmatprep.subr.mxu0 0.0
    %1180 = vmatpush1.msra.mxu0 0.0
    %1181 = vmatprep.subr.mxu0 0.0
    %1182 = vmatpush1.msra.mxu0 0.0
    %1183 = vmatprep.subr.mxu0 0.0
    %1184 = vmatpush1.msra.mxu0 0.0
    %1185 = vmatprep.mubr.f32.mxu0 0.0
    %1186 = vmatmul.mubr.f32.gmra.mrb[0].mxu0 %v1118
    %v1187 = vpop.f32.mrb[0].mxu0
    %v1188 = vadd.f32 0.0, %v1187
    %v1189 = vpop.f32.mrb[0].mxu0
    %v1190 = vadd.f32 0.0, %v1189
    %1191 = vdwg.mxu0
    %1192 = vmatprep.subr.mxu0 %v664
    %1193 = vmatpush1.msra.mxu0 %v663
    %1194 = vmatprep.subr.mxu0 %v668
    %1195 = vmatpush1.msra.mxu0 %v667
    %1196 = vmatprep.subr.mxu0 %v672
    %1197 = vmatpush1.msra.mxu0 %v671
    %1198 = vmatprep.subr.mxu0 %v676
    %1199 = vmatpush1.msra.mxu0 %v675
    %1200 = vmatprep.subr.mxu0 %v680
    %1201 = vmatpush1.msra.mxu0 %v679
    %1202 = vmatprep.subr.mxu0 %v684
    %1203 = vmatpush1.msra.mxu0 %v683
    %1204 = vmatprep.subr.mxu0 %v688
    %1205 = vmatpush1.msra.mxu0 %v687
    %1206 = vmatprep.subr.mxu0 %v692
    %1207 = vmatpush1.msra.mxu0 %v691
    %1208 = vmatprep.subr.mxu0 %v696
    %1209 = vmatpush1.msra.mxu0 %v695
    %1210 = vmatprep.subr.mxu0 %v700
    %1211 = vmatpush1.msra.mxu0 %v699
    %1212 = vmatprep.subr.mxu0 %v704
    %1213 = vmatpush1.msra.mxu0 %v703
    %1214 = vmatprep.subr.mxu0 %v708
    %1215 = vmatpush1.msra.mxu0 %v707
    %1216 = vmatprep.subr.mxu0 %v712
    %1217 = vmatpush1.msra.mxu0 %v711
    %1218 = vmatprep.subr.mxu0 %v716
    %1219 = vmatpush1.msra.mxu0 %v715
    %1220 = vmatprep.subr.mxu0 %v720
    %1221 = vmatpush1.msra.mxu0 %v719
    %1222 = vmatprep.subr.mxu0 %v724
    %1223 = vmatpush1.msra.mxu0 %v723
    %1224 = vmatprep.subr.mxu0 0.0
    %1225 = vmatpush1.msra.mxu0 0.0
    %1226 = vmatprep.subr.mxu0 0.0
    %1227 = vmatpush1.msra.mxu0 0.0
    %1228 = vmatprep.subr.mxu0 0.0
    %1229 = vmatpush1.msra.mxu0 0.0
    %1230 = vmatprep.subr.mxu0 0.0
    %1231 = vmatpush1.msra.mxu0 0.0
    %1232 = vmatprep.subr.mxu0 0.0
    %1233 = vmatpush1.msra.mxu0 0.0
    %1234 = vmatprep.subr.mxu0 0.0
    %1235 = vmatpush1.msra.mxu0 0.0
    %1236 = vmatprep.subr.mxu0 0.0
    %1237 = vmatpush1.msra.mxu0 0.0
    %1238 = vmatprep.subr.mxu0 0.0
    %1239 = vmatpush1.msra.mxu0 0.0
    %1240 = vmatprep.subr.mxu0 0.0
    %1241 = vmatpush1.msra.mxu0 0.0
    %1242 = vmatprep.subr.mxu0 0.0
    %1243 = vmatpush1.msra.mxu0 0.0
    %1244 = vmatprep.subr.mxu0 0.0
    %1245 = vmatpush1.msra.mxu0 0.0
    %1246 = vmatprep.subr.mxu0 0.0
    %1247 = vmatpush1.msra.mxu0 0.0
    %1248 = vmatprep.subr.mxu0 0.0
    %1249 = vmatpush1.msra.mxu0 0.0
    %1250 = vmatprep.subr.mxu0 0.0
    %1251 = vmatpush1.msra.mxu0 0.0
    %1252 = vmatprep.subr.mxu0 0.0
    %1253 = vmatpush1.msra.mxu0 0.0
    %1254 = vmatprep.subr.mxu0 0.0
    %1255 = vmatpush1.msra.mxu0 0.0
    %1256 = vmatprep.mubr.f32.mxu0 0.0
    %1257 = vmatmul.mubr.f32.gmra.mrb[0].mxu0 %v1118
    %v1258 = vpop.f32.mrb[0].mxu0
    %v1259 = vadd.f32 0.0, %v1258
    %v1260 = vpop.f32.mrb[0].mxu0
    %v1261 = vadd.f32 0.0, %v1260
    %1262 = vdwg.mxu0
    %v1267 = vcombine.low %v1188, %v1190
    %v1268 = vcombine.low %v1259, %v1261
    %v1270 = vunpack.c.l.s4 1983009808
    %v1271 = vunpack.c.0.s8 %v1270
    %v1272 = vlaneseq
    %v1273 = vshrl.u32 %v1272, 7
    %v1274 = vsub.s32 %v1271, %v1273
    %v1275 = vrot.slane %v1267, %v1274
    %v1277 = vunpack.c.l.s4 1983009808
    %v1278 = vunpack.c.0.s8 %v1277
    %v1279 = vlaneseq
    %v1280 = vshrl.u32 %v1279, 7
    %v1281 = vsub.s32 %v1278, %v1280
    %v1282 = vrot.slane %v1268, %v1281
    %v1283 = vcombine.low %v1275, %v1282
    %v1285 = vadd.f32 %v1120, %v1283
    %v1286 = vxor.u32 %v1285, 2147483648
    %v1287 = vmul.f32 %v1286, 1.442695
    %v1288 = vpow.pop %v1287
    %v1289 = vadd.f32 %v1288, 1.0
    %v1290 = vrcp.pop %v1289
    %v1291 = vmul.f32 1.0, %v1290
    %v1293 = vrot.slane %v1285, 2
    %v1295 = vxor.u32 %v1293, 2147483648
    %v1296 = vmul.f32 %v1295, 1.442695
    %v1297 = vpow.pop %v1296
    %v1298 = vadd.f32 %v1297, 1.0
    %v1299 = vrcp.pop %v1298
    %v1300 = vmul.f32 1.0, %v1299
    %v1301 = vrot.slane %v1285, 4
    %v1303 = vtanh.pop %v1301
    %v1304 = vrot.slane %v1285, 6
    %v1306 = vxor.u32 %v1304, 2147483648
    %v1307 = vmul.f32 %v1306, 1.442695
    %v1308 = vpow.pop %v1307
    %v1309 = vadd.f32 %v1308, 1.0
    %v1310 = vrcp.pop %v1309
    %v1311 = vmul.f32 1.0, %v1310
    %v1312 = vmul.f32 %v1300, %v1116
    %v1313 = vmul.f32 %v1291, %v1303
    %v1314 = vadd.f32 %v1312, %v1313
    %v1315 = vtanh.pop %v1314
    %v1316 = vmul.f32 %v1311, %v1315
    %s1317 = scalar_lea.vmem [#allocation2], 24
    %v1318 = vld [vmem:[%s1317] sm:$0xff]
    %1319 = vmatprep.subr.mxu0 %v662
    %1320 = vmatpush1.msra.mxu0 %v661
    %1321 = vmatprep.subr.mxu0 %v666
    %1322 = vmatpush1.msra.mxu0 %v665
    %1323 = vmatprep.subr.mxu0 %v670
    %1324 = vmatpush1.msra.mxu0 %v669
    %1325 = vmatprep.subr.mxu0 %v674
    %1326 = vmatpush1.msra.mxu0 %v673
    %1327 = vmatprep.subr.mxu0 %v678
    %1328 = vmatpush1.msra.mxu0 %v677
    %1329 = vmatprep.subr.mxu0 %v682
    %1330 = vmatpush1.msra.mxu0 %v681
    %1331 = vmatprep.subr.mxu0 %v686
    %1332 = vmatpush1.msra.mxu0 %v685
    %1333 = vmatprep.subr.mxu0 %v690
    %1334 = vmatpush1.msra.mxu0 %v689
    %1335 = vmatprep.subr.mxu0 %v694
    %1336 = vmatpush1.msra.mxu0 %v693
    %1337 = vmatprep.subr.mxu0 %v698
    %1338 = vmatpush1.msra.mxu0 %v697
    %1339 = vmatprep.subr.mxu0 %v702
    %1340 = vmatpush1.msra.mxu0 %v701
    %1341 = vmatprep.subr.mxu0 %v706
    %1342 = vmatpush1.msra.mxu0 %v705
    %1343 = vmatprep.subr.mxu0 %v710
    %1344 = vmatpush1.msra.mxu0 %v709
    %1345 = vmatprep.subr.mxu0 %v714
    %1346 = vmatpush1.msra.mxu0 %v713
    %1347 = vmatprep.subr.mxu0 %v718
    %1348 = vmatpush1.msra.mxu0 %v717
    %1349 = vmatprep.subr.mxu0 %v722
    %1350 = vmatpush1.msra.mxu0 %v721
    %1351 = vmatprep.subr.mxu0 0.0
    %1352 = vmatpush1.msra.mxu0 0.0
    %1353 = vmatprep.subr.mxu0 0.0
    %1354 = vmatpush1.msra.mxu0 0.0
    %1355 = vmatprep.subr.mxu0 0.0
    %1356 = vmatpush1.msra.mxu0 0.0
    %1357 = vmatprep.subr.mxu0 0.0
    %1358 = vmatpush1.msra.mxu0 0.0
    %1359 = vmatprep.subr.mxu0 0.0
    %1360 = vmatpush1.msra.mxu0 0.0
    %1361 = vmatprep.subr.mxu0 0.0
    %1362 = vmatpush1.msra.mxu0 0.0
    %1363 = vmatprep.subr.mxu0 0.0
    %1364 = vmatpush1.msra.mxu0 0.0
    %1365 = vmatprep.subr.mxu0 0.0
    %1366 = vmatpush1.msra.mxu0 0.0
    %1367 = vmatprep.subr.mxu0 0.0
    %1368 = vmatpush1.msra.mxu0 0.0
    %1369 = vmatprep.subr.mxu0 0.0
    %1370 = vmatpush1.msra.mxu0 0.0
    %1371 = vmatprep.subr.mxu0 0.0
    %1372 = vmatpush1.msra.mxu0 0.0
    %1373 = vmatprep.subr.mxu0 0.0
    %1374 = vmatpush1.msra.mxu0 0.0
    %1375 = vmatprep.subr.mxu0 0.0
    %1376 = vmatpush1.msra.mxu0 0.0
    %1377 = vmatprep.subr.mxu0 0.0
    %1378 = vmatpush1.msra.mxu0 0.0
    %1379 = vmatprep.subr.mxu0 0.0
    %1380 = vmatpush1.msra.mxu0 0.0
    %1381 = vmatprep.subr.mxu0 0.0
    %1382 = vmatpush1.msra.mxu0 0.0
    %1383 = vmatprep.mubr.f32.mxu0 0.0
    %1384 = vmatmul.mubr.f32.gmra.mrb[0].mxu0 %v1316
    %v1385 = vpop.f32.mrb[0].mxu0
    %v1386 = vadd.f32 0.0, %v1385
    %v1387 = vpop.f32.mrb[0].mxu0
    %v1388 = vadd.f32 0.0, %v1387
    %1389 = vdwg.mxu0
    %1390 = vmatprep.subr.mxu0 %v664
    %1391 = vmatpush1.msra.mxu0 %v663
    %1392 = vmatprep.subr.mxu0 %v668
    %1393 = vmatpush1.msra.mxu0 %v667
    %1394 = vmatprep.subr.mxu0 %v672
    %1395 = vmatpush1.msra.mxu0 %v671
    %1396 = vmatprep.subr.mxu0 %v676
    %1397 = vmatpush1.msra.mxu0 %v675
    %1398 = vmatprep.subr.mxu0 %v680
    %1399 = vmatpush1.msra.mxu0 %v679
    %1400 = vmatprep.subr.mxu0 %v684
    %1401 = vmatpush1.msra.mxu0 %v683
    %1402 = vmatprep.subr.mxu0 %v688
    %1403 = vmatpush1.msra.mxu0 %v687
    %1404 = vmatprep.subr.mxu0 %v692
    %1405 = vmatpush1.msra.mxu0 %v691
    %1406 = vmatprep.subr.mxu0 %v696
    %1407 = vmatpush1.msra.mxu0 %v695
    %1408 = vmatprep.subr.mxu0 %v700
    %1409 = vmatpush1.msra.mxu0 %v699
    %1410 = vmatprep.subr.mxu0 %v704
    %1411 = vmatpush1.msra.mxu0 %v703
    %1412 = vmatprep.subr.mxu0 %v708
    %1413 = vmatpush1.msra.mxu0 %v707
    %1414 = vmatprep.subr.mxu0 %v712
    %1415 = vmatpush1.msra.mxu0 %v711
    %1416 = vmatprep.subr.mxu0 %v716
    %1417 = vmatpush1.msra.mxu0 %v715
    %1418 = vmatprep.subr.mxu0 %v720
    %1419 = vmatpush1.msra.mxu0 %v719
    %1420 = vmatprep.subr.mxu0 %v724
    %1421 = vmatpush1.msra.mxu0 %v723
    %1422 = vmatprep.subr.mxu0 0.0
    %1423 = vmatpush1.msra.mxu0 0.0
    %1424 = vmatprep.subr.mxu0 0.0
    %1425 = vmatpush1.msra.mxu0 0.0
    %1426 = vmatprep.subr.mxu0 0.0
    %1427 = vmatpush1.msra.mxu0 0.0
    %1428 = vmatprep.subr.mxu0 0.0
    %1429 = vmatpush1.msra.mxu0 0.0
    %1430 = vmatprep.subr.mxu0 0.0
    %1431 = vmatpush1.msra.mxu0 0.0
    %1432 = vmatprep.subr.mxu0 0.0
    %1433 = vmatpush1.msra.mxu0 0.0
    %1434 = vmatprep.subr.mxu0 0.0
    %1435 = vmatpush1.msra.mxu0 0.0
    %1436 = vmatprep.subr.mxu0 0.0
    %1437 = vmatpush1.msra.mxu0 0.0
    %1438 = vmatprep.subr.mxu0 0.0
    %1439 = vmatpush1.msra.mxu0 0.0
    %1440 = vmatprep.subr.mxu0 0.0
    %1441 = vmatpush1.msra.mxu0 0.0
    %1442 = vmatprep.subr.mxu0 0.0
    %1443 = vmatpush1.msra.mxu0 0.0
    %1444 = vmatprep.subr.mxu0 0.0
    %1445 = vmatpush1.msra.mxu0 0.0
    %1446 = vmatprep.subr.mxu0 0.0
    %1447 = vmatpush1.msra.mxu0 0.0
    %1448 = vmatprep.subr.mxu0 0.0
    %1449 = vmatpush1.msra.mxu0 0.0
    %1450 = vmatprep.subr.mxu0 0.0
    %1451 = vmatpush1.msra.mxu0 0.0
    %1452 = vmatprep.subr.mxu0 0.0
    %1453 = vmatpush1.msra.mxu0 0.0
    %1454 = vmatprep.mubr.f32.mxu0 0.0
    %1455 = vmatmul.mubr.f32.gmra.mrb[0].mxu0 %v1316
    %v1456 = vpop.f32.mrb[0].mxu0
    %v1457 = vadd.f32 0.0, %v1456
    %v1458 = vpop.f32.mrb[0].mxu0
    %v1459 = vadd.f32 0.0, %v1458
    %1460 = vdwg.mxu0
    %v1465 = vcombine.low %v1386, %v1388
    %v1466 = vcombine.low %v1457, %v1459
    %v1468 = vunpack.c.l.s4 1983009808
    %v1469 = vunpack.c.0.s8 %v1468
    %v1470 = vlaneseq
    %v1471 = vshrl.u32 %v1470, 7
    %v1472 = vsub.s32 %v1469, %v1471
    %v1473 = vrot.slane %v1465, %v1472
    %v1475 = vunpack.c.l.s4 1983009808
    %v1476 = vunpack.c.0.s8 %v1475
    %v1477 = vlaneseq
    %v1478 = vshrl.u32 %v1477, 7
    %v1479 = vsub.s32 %v1476, %v1478
    %v1480 = vrot.slane %v1466, %v1479
    %v1481 = vcombine.low %v1473, %v1480
    %v1483 = vadd.f32 %v1318, %v1481
    %v1484 = vxor.u32 %v1483, 2147483648
    %v1485 = vmul.f32 %v1484, 1.442695
    %v1486 = vpow.pop %v1485
    %v1487 = vadd.f32 %v1486, 1.0
    %v1488 = vrcp.pop %v1487
    %v1489 = vmul.f32 1.0, %v1488
    %v1491 = vrot.slane %v1483, 2
    %v1493 = vxor.u32 %v1491, 2147483648
    %v1494 = vmul.f32 %v1493, 1.442695
    %v1495 = vpow.pop %v1494
    %v1496 = vadd.f32 %v1495, 1.0
    %v1497 = vrcp.pop %v1496
    %v1498 = vmul.f32 1.0, %v1497
    %v1499 = vrot.slane %v1483, 4
    %v1501 = vtanh.pop %v1499
    %v1502 = vrot.slane %v1483, 6
    %v1504 = vxor.u32 %v1502, 2147483648
    %v1505 = vmul.f32 %v1504, 1.442695
    %v1506 = vpow.pop %v1505
    %v1507 = vadd.f32 %v1506, 1.0
    %v1508 = vrcp.pop %v1507
    %v1509 = vmul.f32 1.0, %v1508
    %v1510 = vmul.f32 %v1498, %v1314
    %v1511 = vmul.f32 %v1489, %v1501
    %v1512 = vadd.f32 %v1510, %v1511
    %v1513 = vtanh.pop %v1512
    %v1514 = vmul.f32 %v1509, %v1513
    %s1515 = scalar_lea.vmem [#allocation2], 32
    %v1516 = vld [vmem:[%s1515] sm:$0xff]
    %1517 = vmatprep.subr.mxu0 %v662
    %1518 = vmatpush1.msra.mxu0 %v661
    %1519 = vmatprep.subr.mxu0 %v666
    %1520 = vmatpush1.msra.mxu0 %v665
    %1521 = vmatprep.subr.mxu0 %v670
    %1522 = vmatpush1.msra.mxu0 %v669
    %1523 = vmatprep.subr.mxu0 %v674
    %1524 = vmatpush1.msra.mxu0 %v673
    %1525 = vmatprep.subr.mxu0 %v678
    %1526 = vmatpush1.msra.mxu0 %v677
    %1527 = vmatprep.subr.mxu0 %v682
    %1528 = vmatpush1.msra.mxu0 %v681
    %1529 = vmatprep.subr.mxu0 %v686
    %1530 = vmatpush1.msra.mxu0 %v685
    %1531 = vmatprep.subr.mxu0 %v690
    %1532 = vmatpush1.msra.mxu0 %v689
    %1533 = vmatprep.subr.mxu0 %v694
    %1534 = vmatpush1.msra.mxu0 %v693
    %1535 = vmatprep.subr.mxu0 %v698
    %1536 = vmatpush1.msra.mxu0 %v697
    %1537 = vmatprep.subr.mxu0 %v702
    %1538 = vmatpush1.msra.mxu0 %v701
    %1539 = vmatprep.subr.mxu0 %v706
    %1540 = vmatpush1.msra.mxu0 %v705
    %1541 = vmatprep.subr.mxu0 %v710
    %1542 = vmatpush1.msra.mxu0 %v709
    %1543 = vmatprep.subr.mxu0 %v714
    %1544 = vmatpush1.msra.mxu0 %v713
    %1545 = vmatprep.subr.mxu0 %v718
    %1546 = vmatpush1.msra.mxu0 %v717
    %1547 = vmatprep.subr.mxu0 %v722
    %1548 = vmatpush1.msra.mxu0 %v721
    %1549 = vmatprep.subr.mxu0 0.0
    %1550 = vmatpush1.msra.mxu0 0.0
    %1551 = vmatprep.subr.mxu0 0.0
    %1552 = vmatpush1.msra.mxu0 0.0
    %1553 = vmatprep.subr.mxu0 0.0
    %1554 = vmatpush1.msra.mxu0 0.0
    %1555 = vmatprep.subr.mxu0 0.0
    %1556 = vmatpush1.msra.mxu0 0.0
    %1557 = vmatprep.subr.mxu0 0.0
    %1558 = vmatpush1.msra.mxu0 0.0
    %1559 = vmatprep.subr.mxu0 0.0
    %1560 = vmatpush1.msra.mxu0 0.0
    %1561 = vmatprep.subr.mxu0 0.0
    %1562 = vmatpush1.msra.mxu0 0.0
    %1563 = vmatprep.subr.mxu0 0.0
    %1564 = vmatpush1.msra.mxu0 0.0
    %1565 = vmatprep.subr.mxu0 0.0
    %1566 = vmatpush1.msra.mxu0 0.0
    %1567 = vmatprep.subr.mxu0 0.0
    %1568 = vmatpush1.msra.mxu0 0.0
    %1569 = vmatprep.subr.mxu0 0.0
    %1570 = vmatpush1.msra.mxu0 0.0
    %1571 = vmatprep.subr.mxu0 0.0
    %1572 = vmatpush1.msra.mxu0 0.0
    %1573 = vmatprep.subr.mxu0 0.0
    %1574 = vmatpush1.msra.mxu0 0.0
    %1575 = vmatprep.subr.mxu0 0.0
    %1576 = vmatpush1.msra.mxu0 0.0
    %1577 = vmatprep.subr.mxu0 0.0
    %1578 = vmatpush1.msra.mxu0 0.0
    %1579 = vmatprep.subr.mxu0 0.0
    %1580 = vmatpush1.msra.mxu0 0.0
    %1581 = vmatprep.mubr.f32.mxu0 0.0
    %1582 = vmatmul.mubr.f32.gmra.mrb[0].mxu0 %v1514
    %v1583 = vpop.f32.mrb[0].mxu0
    %v1584 = vadd.f32 0.0, %v1583
    %v1585 = vpop.f32.mrb[0].mxu0
    %v1586 = vadd.f32 0.0, %v1585
    %1587 = vdwg.mxu0
    %1588 = vmatprep.subr.mxu0 %v664
    %1589 = vmatpush1.msra.mxu0 %v663
    %1590 = vmatprep.subr.mxu0 %v668
    %1591 = vmatpush1.msra.mxu0 %v667
    %1592 = vmatprep.subr.mxu0 %v672
    %1593 = vmatpush1.msra.mxu0 %v671
    %1594 = vmatprep.subr.mxu0 %v676
    %1595 = vmatpush1.msra.mxu0 %v675
    %1596 = vmatprep.subr.mxu0 %v680
    %1597 = vmatpush1.msra.mxu0 %v679
    %1598 = vmatprep.subr.mxu0 %v684
    %1599 = vmatpush1.msra.mxu0 %v683
    %1600 = vmatprep.subr.mxu0 %v688
    %1601 = vmatpush1.msra.mxu0 %v687
    %1602 = vmatprep.subr.mxu0 %v692
    %1603 = vmatpush1.msra.mxu0 %v691
    %1604 = vmatprep.subr.mxu0 %v696
    %1605 = vmatpush1.msra.mxu0 %v695
    %1606 = vmatprep.subr.mxu0 %v700
    %1607 = vmatpush1.msra.mxu0 %v699
    %1608 = vmatprep.subr.mxu0 %v704
    %1609 = vmatpush1.msra.mxu0 %v703
    %1610 = vmatprep.subr.mxu0 %v708
    %1611 = vmatpush1.msra.mxu0 %v707
    %1612 = vmatprep.subr.mxu0 %v712
    %1613 = vmatpush1.msra.mxu0 %v711
    %1614 = vmatprep.subr.mxu0 %v716
    %1615 = vmatpush1.msra.mxu0 %v715
    %1616 = vmatprep.subr.mxu0 %v720
    %1617 = vmatpush1.msra.mxu0 %v719
    %1618 = vmatprep.subr.mxu0 %v724
    %1619 = vmatpush1.msra.mxu0 %v723
    %1620 = vmatprep.subr.mxu0 0.0
    %1621 = vmatpush1.msra.mxu0 0.0
    %1622 = vmatprep.subr.mxu0 0.0
    %1623 = vmatpush1.msra.mxu0 0.0
    %1624 = vmatprep.subr.mxu0 0.0
    %1625 = vmatpush1.msra.mxu0 0.0
    %1626 = vmatprep.subr.mxu0 0.0
    %1627 = vmatpush1.msra.mxu0 0.0
    %1628 = vmatprep.subr.mxu0 0.0
    %1629 = vmatpush1.msra.mxu0 0.0
    %1630 = vmatprep.subr.mxu0 0.0
    %1631 = vmatpush1.msra.mxu0 0.0
    %1632 = vmatprep.subr.mxu0 0.0
    %1633 = vmatpush1.msra.mxu0 0.0
    %1634 = vmatprep.subr.mxu0 0.0
    %1635 = vmatpush1.msra.mxu0 0.0
    %1636 = vmatprep.subr.mxu0 0.0
    %1637 = vmatpush1.msra.mxu0 0.0
    %1638 = vmatprep.subr.mxu0 0.0
    %1639 = vmatpush1.msra.mxu0 0.0
    %1640 = vmatprep.subr.mxu0 0.0
    %1641 = vmatpush1.msra.mxu0 0.0
    %1642 = vmatprep.subr.mxu0 0.0
    %1643 = vmatpush1.msra.mxu0 0.0
    %1644 = vmatprep.subr.mxu0 0.0
    %1645 = vmatpush1.msra.mxu0 0.0
    %1646 = vmatprep.subr.mxu0 0.0
    %1647 = vmatpush1.msra.mxu0 0.0
    %1648 = vmatprep.subr.mxu0 0.0
    %1649 = vmatpush1.msra.mxu0 0.0
    %1650 = vmatprep.subr.mxu0 0.0
    %1651 = vmatpush1.msra.mxu0 0.0
    %1652 = vmatprep.mubr.f32.mxu0 0.0
    %1653 = vmatmul.mubr.f32.gmra.mrb[0].mxu0 %v1514
    %v1654 = vpop.f32.mrb[0].mxu0
    %v1655 = vadd.f32 0.0, %v1654
    %v1656 = vpop.f32.mrb[0].mxu0
    %v1657 = vadd.f32 0.0, %v1656
    %1658 = vdwg.mxu0
    %v1663 = vcombine.low %v1584, %v1586
    %v1664 = vcombine.low %v1655, %v1657
    %v1666 = vunpack.c.l.s4 1983009808
    %v1667 = vunpack.c.0.s8 %v1666
    %v1668 = vlaneseq
    %v1669 = vshrl.u32 %v1668, 7
    %v1670 = vsub.s32 %v1667, %v1669
    %v1671 = vrot.slane %v1663, %v1670
    %v1673 = vunpack.c.l.s4 1983009808
    %v1674 = vunpack.c.0.s8 %v1673
    %v1675 = vlaneseq
    %v1676 = vshrl.u32 %v1675, 7
    %v1677 = vsub.s32 %v1674, %v1676
    %v1678 = vrot.slane %v1664, %v1677
    %v1679 = vcombine.low %v1671, %v1678
    %v1681 = vadd.f32 %v1516, %v1679
    %v1682 = vxor.u32 %v1681, 2147483648
    %v1683 = vmul.f32 %v1682, 1.442695
    %v1684 = vpow.pop %v1683
    %v1685 = vadd.f32 %v1684, 1.0
    %v1686 = vrcp.pop %v1685
    %v1687 = vmul.f32 1.0, %v1686
    %v1689 = vrot.slane %v1681, 2
    %v1691 = vxor.u32 %v1689, 2147483648
    %v1692 = vmul.f32 %v1691, 1.442695
    %v1693 = vpow.pop %v1692
    %v1694 = vadd.f32 %v1693, 1.0
    %v1695 = vrcp.pop %v1694
    %v1696 = vmul.f32 1.0, %v1695
    %v1697 = vrot.slane %v1681, 4
    %v1699 = vtanh.pop %v1697
    %v1700 = vrot.slane %v1681, 6
    %v1702 = vxor.u32 %v1700, 2147483648
    %v1703 = vmul.f32 %v1702, 1.442695
    %v1704 = vpow.pop %v1703
    %v1705 = vadd.f32 %v1704, 1.0
    %v1706 = vrcp.pop %v1705
    %v1707 = vmul.f32 1.0, %v1706
    %v1708 = vmul.f32 %v1696, %v1512
    %v1709 = vmul.f32 %v1687, %v1699
    %v1710 = vadd.f32 %v1708, %v1709
    %v1711 = vtanh.pop %v1710
    %v1712 = vmul.f32 %v1707, %v1711
    %s1713 = scalar_lea.vmem [#allocation2], 40
    %v1714 = vld [vmem:[%s1713] sm:$0xff]
    %1715 = vmatprep.subr.mxu0 %v662
    %1716 = vmatpush1.msra.mxu0 %v661
    %1717 = vmatprep.subr.mxu0 %v666
    %1718 = vmatpush1.msra.mxu0 %v665
    %1719 = vmatprep.subr.mxu0 %v670
    %1720 = vmatpush1.msra.mxu0 %v669
    %1721 = vmatprep.subr.mxu0 %v674
    %1722 = vmatpush1.msra.mxu0 %v673
    %1723 = vmatprep.subr.mxu0 %v678
    %1724 = vmatpush1.msra.mxu0 %v677
    %1725 = vmatprep.subr.mxu0 %v682
    %1726 = vmatpush1.msra.mxu0 %v681
    %1727 = vmatprep.subr.mxu0 %v686
    %1728 = vmatpush1.msra.mxu0 %v685
    %1729 = vmatprep.subr.mxu0 %v690
    %1730 = vmatpush1.msra.mxu0 %v689
    %1731 = vmatprep.subr.mxu0 %v694
    %1732 = vmatpush1.msra.mxu0 %v693
    %1733 = vmatprep.subr.mxu0 %v698
    %1734 = vmatpush1.msra.mxu0 %v697
    %1735 = vmatprep.subr.mxu0 %v702
    %1736 = vmatpush1.msra.mxu0 %v701
    %1737 = vmatprep.subr.mxu0 %v706
    %1738 = vmatpush1.msra.mxu0 %v705
    %1739 = vmatprep.subr.mxu0 %v710
    %1740 = vmatpush1.msra.mxu0 %v709
    %1741 = vmatprep.subr.mxu0 %v714
    %1742 = vmatpush1.msra.mxu0 %v713
    %1743 = vmatprep.subr.mxu0 %v718
    %1744 = vmatpush1.msra.mxu0 %v717
    %1745 = vmatprep.subr.mxu0 %v722
    %1746 = vmatpush1.msra.mxu0 %v721
    %1747 = vmatprep.subr.mxu0 0.0
    %1748 = vmatpush1.msra.mxu0 0.0
    %1749 = vmatprep.subr.mxu0 0.0
    %1750 = vmatpush1.msra.mxu0 0.0
    %1751 = vmatprep.subr.mxu0 0.0
    %1752 = vmatpush1.msra.mxu0 0.0
    %1753 = vmatprep.subr.mxu0 0.0
    %1754 = vmatpush1.msra.mxu0 0.0
    %1755 = vmatprep.subr.mxu0 0.0
    %1756 = vmatpush1.msra.mxu0 0.0
    %1757 = vmatprep.subr.mxu0 0.0
    %1758 = vmatpush1.msra.mxu0 0.0
    %1759 = vmatprep.subr.mxu0 0.0
    %1760 = vmatpush1.msra.mxu0 0.0
    %1761 = vmatprep.subr.mxu0 0.0
    %1762 = vmatpush1.msra.mxu0 0.0
    %1763 = vmatprep.subr.mxu0 0.0
    %1764 = vmatpush1.msra.mxu0 0.0
    %1765 = vmatprep.subr.mxu0 0.0
    %1766 = vmatpush1.msra.mxu0 0.0
    %1767 = vmatprep.subr.mxu0 0.0
    %1768 = vmatpush1.msra.mxu0 0.0
    %1769 = vmatprep.subr.mxu0 0.0
    %1770 = vmatpush1.msra.mxu0 0.0
    %1771 = vmatprep.subr.mxu0 0.0
    %1772 = vmatpush1.msra.mxu0 0.0
    %1773 = vmatprep.subr.mxu0 0.0
    %1774 = vmatpush1.msra.mxu0 0.0
    %1775 = vmatprep.subr.mxu0 0.0
    %1776 = vmatpush1.msra.mxu0 0.0
    %1777 = vmatprep.subr.mxu0 0.0
    %1778 = vmatpush1.msra.mxu0 0.0
    %1779 = vmatprep.mubr.f32.mxu0 0.0
    %1780 = vmatmul.mubr.f32.gmra.mrb[0].mxu0 %v1712
    %v1781 = vpop.f32.mrb[0].mxu0
    %v1782 = vadd.f32 0.0, %v1781
    %v1783 = vpop.f32.mrb[0].mxu0
    %v1784 = vadd.f32 0.0, %v1783
    %1785 = vdwg.mxu0
    %1786 = vmatprep.subr.mxu0 %v664
    %1787 = vmatpush1.msra.mxu0 %v663
    %1788 = vmatprep.subr.mxu0 %v668
    %1789 = vmatpush1.msra.mxu0 %v667
    %1790 = vmatprep.subr.mxu0 %v672
    %1791 = vmatpush1.msra.mxu0 %v671
    %1792 = vmatprep.subr.mxu0 %v676
    %1793 = vmatpush1.msra.mxu0 %v675
    %1794 = vmatprep.subr.mxu0 %v680
    %1795 = vmatpush1.msra.mxu0 %v679
    %1796 = vmatprep.subr.mxu0 %v684
    %1797 = vmatpush1.msra.mxu0 %v683
    %1798 = vmatprep.subr.mxu0 %v688
    %1799 = vmatpush1.msra.mxu0 %v687
    %1800 = vmatprep.subr.mxu0 %v692
    %1801 = vmatpush1.msra.mxu0 %v691
    %1802 = vmatprep.subr.mxu0 %v696
    %1803 = vmatpush1.msra.mxu0 %v695
    %1804 = vmatprep.subr.mxu0 %v700
    %1805 = vmatpush1.msra.mxu0 %v699
    %1806 = vmatprep.subr.mxu0 %v704
    %1807 = vmatpush1.msra.mxu0 %v703
    %1808 = vmatprep.subr.mxu0 %v708
    %1809 = vmatpush1.msra.mxu0 %v707
    %1810 = vmatprep.subr.mxu0 %v712
    %1811 = vmatpush1.msra.mxu0 %v711
    %1812 = vmatprep.subr.mxu0 %v716
    %1813 = vmatpush1.msra.mxu0 %v715
    %1814 = vmatprep.subr.mxu0 %v720
    %1815 = vmatpush1.msra.mxu0 %v719
    %1816 = vmatprep.subr.mxu0 %v724
    %1817 = vmatpush1.msra.mxu0 %v723
    %1818 = vmatprep.subr.mxu0 0.0
    %1819 = vmatpush1.msra.mxu0 0.0
    %1820 = vmatprep.subr.mxu0 0.0
    %1821 = vmatpush1.msra.mxu0 0.0
    %1822 = vmatprep.subr.mxu0 0.0
    %1823 = vmatpush1.msra.mxu0 0.0
    %1824 = vmatprep.subr.mxu0 0.0
    %1825 = vmatpush1.msra.mxu0 0.0
    %1826 = vmatprep.subr.mxu0 0.0
    %1827 = vmatpush1.msra.mxu0 0.0
    %1828 = vmatprep.subr.mxu0 0.0
    %1829 = vmatpush1.msra.mxu0 0.0
    %1830 = vmatprep.subr.mxu0 0.0
    %1831 = vmatpush1.msra.mxu0 0.0
    %1832 = vmatprep.subr.mxu0 0.0
    %1833 = vmatpush1.msra.mxu0 0.0
    %1834 = vmatprep.subr.mxu0 0.0
    %1835 = vmatpush1.msra.mxu0 0.0
    %1836 = vmatprep.subr.mxu0 0.0
    %1837 = vmatpush1.msra.mxu0 0.0
    %1838 = vmatprep.subr.mxu0 0.0
    %1839 = vmatpush1.msra.mxu0 0.0
    %1840 = vmatprep.subr.mxu0 0.0
    %1841 = vmatpush1.msra.mxu0 0.0
    %1842 = vmatprep.subr.mxu0 0.0
    %1843 = vmatpush1.msra.mxu0 0.0
    %1844 = vmatprep.subr.mxu0 0.0
    %1845 = vmatpush1.msra.mxu0 0.0
    %1846 = vmatprep.subr.mxu0 0.0
    %1847 = vmatpush1.msra.mxu0 0.0
    %1848 = vmatprep.subr.mxu0 0.0
    %1849 = vmatpush1.msra.mxu0 0.0
    %1850 = vmatprep.mubr.f32.mxu0 0.0
    %1851 = vmatmul.mubr.f32.gmra.mrb[0].mxu0 %v1712
    %v1852 = vpop.f32.mrb[0].mxu0
    %v1853 = vadd.f32 0.0, %v1852
    %v1854 = vpop.f32.mrb[0].mxu0
    %v1855 = vadd.f32 0.0, %v1854
    %1856 = vdwg.mxu0
    %v1861 = vcombine.low %v1782, %v1784
    %v1862 = vcombine.low %v1853, %v1855
    %v1864 = vunpack.c.l.s4 1983009808
    %v1865 = vunpack.c.0.s8 %v1864
    %v1866 = vlaneseq
    %v1867 = vshrl.u32 %v1866, 7
    %v1868 = vsub.s32 %v1865, %v1867
    %v1869 = vrot.slane %v1861, %v1868
    %v1871 = vunpack.c.l.s4 1983009808
    %v1872 = vunpack.c.0.s8 %v1871
    %v1873 = vlaneseq
    %v1874 = vshrl.u32 %v1873, 7
    %v1875 = vsub.s32 %v1872, %v1874
    %v1876 = vrot.slane %v1862, %v1875
    %v1877 = vcombine.low %v1869, %v1876
    %v1879 = vadd.f32 %v1714, %v1877
    %v1880 = vxor.u32 %v1879, 2147483648
    %v1881 = vmul.f32 %v1880, 1.442695
    %v1882 = vpow.pop %v1881
    %v1883 = vadd.f32 %v1882, 1.0
    %v1884 = vrcp.pop %v1883
    %v1885 = vmul.f32 1.0, %v1884
    %v1887 = vrot.slane %v1879, 2
    %v1889 = vxor.u32 %v1887, 2147483648
    %v1890 = vmul.f32 %v1889, 1.442695
    %v1891 = vpow.pop %v1890
    %v1892 = vadd.f32 %v1891, 1.0
    %v1893 = vrcp.pop %v1892
    %v1894 = vmul.f32 1.0, %v1893
    %v1895 = vrot.slane %v1879, 4
    %v1897 = vtanh.pop %v1895
    %v1898 = vrot.slane %v1879, 6
    %v1900 = vxor.u32 %v1898, 2147483648
    %v1901 = vmul.f32 %v1900, 1.442695
    %v1902 = vpow.pop %v1901
    %v1903 = vadd.f32 %v1902, 1.0
    %v1904 = vrcp.pop %v1903
    %v1905 = vmul.f32 1.0, %v1904
    %v1906 = vmul.f32 %v1894, %v1710
    %v1907 = vmul.f32 %v1885, %v1897
    %v1908 = vadd.f32 %v1906, %v1907
    %v1909 = vtanh.pop %v1908
    %v1910 = vmul.f32 %v1905, %v1909
    %s1911 = scalar_lea.vmem [#allocation2], 48
    %v1912 = vld [vmem:[%s1911] sm:$0xff]
    %1913 = vmatprep.subr.mxu0 %v662
    %1914 = vmatpush1.msra.mxu0 %v661
    %1915 = vmatprep.subr.mxu0 %v666
    %1916 = vmatpush1.msra.mxu0 %v665
    %1917 = vmatprep.subr.mxu0 %v670
    %1918 = vmatpush1.msra.mxu0 %v669
    %1919 = vmatprep.subr.mxu0 %v674
    %1920 = vmatpush1.msra.mxu0 %v673
    %1921 = vmatprep.subr.mxu0 %v678
    %1922 = vmatpush1.msra.mxu0 %v677
    %1923 = vmatprep.subr.mxu0 %v682
    %1924 = vmatpush1.msra.mxu0 %v681
    %1925 = vmatprep.subr.mxu0 %v686
    %1926 = vmatpush1.msra.mxu0 %v685
    %1927 = vmatprep.subr.mxu0 %v690
    %1928 = vmatpush1.msra.mxu0 %v689
    %1929 = vmatprep.subr.mxu0 %v694
    %1930 = vmatpush1.msra.mxu0 %v693
    %1931 = vmatprep.subr.mxu0 %v698
    %1932 = vmatpush1.msra.mxu0 %v697
    %1933 = vmatprep.subr.mxu0 %v702
    %1934 = vmatpush1.msra.mxu0 %v701
    %1935 = vmatprep.subr.mxu0 %v706
    %1936 = vmatpush1.msra.mxu0 %v705
    %1937 = vmatprep.subr.mxu0 %v710
    %1938 = vmatpush1.msra.mxu0 %v709
    %1939 = vmatprep.subr.mxu0 %v714
    %1940 = vmatpush1.msra.mxu0 %v713
    %1941 = vmatprep.subr.mxu0 %v718
    %1942 = vmatpush1.msra.mxu0 %v717
    %1943 = vmatprep.subr.mxu0 %v722
    %1944 = vmatpush1.msra.mxu0 %v721
    %1945 = vmatprep.subr.mxu0 0.0
    %1946 = vmatpush1.msra.mxu0 0.0
    %1947 = vmatprep.subr.mxu0 0.0
    %1948 = vmatpush1.msra.mxu0 0.0
    %1949 = vmatprep.subr.mxu0 0.0
    %1950 = vmatpush1.msra.mxu0 0.0
    %1951 = vmatprep.subr.mxu0 0.0
    %1952 = vmatpush1.msra.mxu0 0.0
    %1953 = vmatprep.subr.mxu0 0.0
    %1954 = vmatpush1.msra.mxu0 0.0
    %1955 = vmatprep.subr.mxu0 0.0
    %1956 = vmatpush1.msra.mxu0 0.0
    %1957 = vmatprep.subr.mxu0 0.0
    %1958 = vmatpush1.msra.mxu0 0.0
    %1959 = vmatprep.subr.mxu0 0.0
    %1960 = vmatpush1.msra.mxu0 0.0
    %1961 = vmatprep.subr.mxu0 0.0
    %1962 = vmatpush1.msra.mxu0 0.0
    %1963 = vmatprep.subr.mxu0 0.0
    %1964 = vmatpush1.msra.mxu0 0.0
    %1965 = vmatprep.subr.mxu0 0.0
    %1966 = vmatpush1.msra.mxu0 0.0
    %1967 = vmatprep.subr.mxu0 0.0
    %1968 = vmatpush1.msra.mxu0 0.0
    %1969 = vmatprep.subr.mxu0 0.0
    %1970 = vmatpush1.msra.mxu0 0.0
    %1971 = vmatprep.subr.mxu0 0.0
    %1972 = vmatpush1.msra.mxu0 0.0
    %1973 = vmatprep.subr.mxu0 0.0
    %1974 = vmatpush1.msra.mxu0 0.0
    %1975 = vmatprep.subr.mxu0 0.0
    %1976 = vmatpush1.msra.mxu0 0.0
    %1977 = vmatprep.mubr.f32.mxu0 0.0
    %1978 = vmatmul.mubr.f32.gmra.mrb[0].mxu0 %v1910
    %v1979 = vpop.f32.mrb[0].mxu0
    %v1980 = vadd.f32 0.0, %v1979
    %v1981 = vpop.f32.mrb[0].mxu0
    %v1982 = vadd.f32 0.0, %v1981
    %1983 = vdwg.mxu0
    %1984 = vmatprep.subr.mxu0 %v664
    %1985 = vmatpush1.msra.mxu0 %v663
    %1986 = vmatprep.subr.mxu0 %v668
    %1987 = vmatpush1.msra.mxu0 %v667
    %1988 = vmatprep.subr.mxu0 %v672
    %1989 = vmatpush1.msra.mxu0 %v671
    %1990 = vmatprep.subr.mxu0 %v676
    %1991 = vmatpush1.msra.mxu0 %v675
    %1992 = vmatprep.subr.mxu0 %v680
    %1993 = vmatpush1.msra.mxu0 %v679
    %1994 = vmatprep.subr.mxu0 %v684
    %1995 = vmatpush1.msra.mxu0 %v683
    %1996 = vmatprep.subr.mxu0 %v688
    %1997 = vmatpush1.msra.mxu0 %v687
    %1998 = vmatprep.subr.mxu0 %v692
    %1999 = vmatpush1.msra.mxu0 %v691
    %2000 = vmatprep.subr.mxu0 %v696
    %2001 = vmatpush1.msra.mxu0 %v695
    %2002 = vmatprep.subr.mxu0 %v700
    %2003 = vmatpush1.msra.mxu0 %v699
    %2004 = vmatprep.subr.mxu0 %v704
    %2005 = vmatpush1.msra.mxu0 %v703
    %2006 = vmatprep.subr.mxu0 %v708
    %2007 = vmatpush1.msra.mxu0 %v707
    %2008 = vmatprep.subr.mxu0 %v712
    %2009 = vmatpush1.msra.mxu0 %v711
    %2010 = vmatprep.subr.mxu0 %v716
    %2011 = vmatpush1.msra.mxu0 %v715
    %2012 = vmatprep.subr.mxu0 %v720
    %2013 = vmatpush1.msra.mxu0 %v719
    %2014 = vmatprep.subr.mxu0 %v724
    %2015 = vmatpush1.msra.mxu0 %v723
    %2016 = vmatprep.subr.mxu0 0.0
    %2017 = vmatpush1.msra.mxu0 0.0
    %2018 = vmatprep.subr.mxu0 0.0
    %2019 = vmatpush1.msra.mxu0 0.0
    %2020 = vmatprep.subr.mxu0 0.0
    %2021 = vmatpush1.msra.mxu0 0.0
    %2022 = vmatprep.subr.mxu0 0.0
    %2023 = vmatpush1.msra.mxu0 0.0
    %2024 = vmatprep.subr.mxu0 0.0
    %2025 = vmatpush1.msra.mxu0 0.0
    %2026 = vmatprep.subr.mxu0 0.0
    %2027 = vmatpush1.msra.mxu0 0.0
    %2028 = vmatprep.subr.mxu0 0.0
    %2029 = vmatpush1.msra.mxu0 0.0
    %2030 = vmatprep.subr.mxu0 0.0
    %2031 = vmatpush1.msra.mxu0 0.0
    %2032 = vmatprep.subr.mxu0 0.0
    %2033 = vmatpush1.msra.mxu0 0.0
    %2034 = vmatprep.subr.mxu0 0.0
    %2035 = vmatpush1.msra.mxu0 0.0
    %2036 = vmatprep.subr.mxu0 0.0
    %2037 = vmatpush1.msra.mxu0 0.0
    %2038 = vmatprep.subr.mxu0 0.0
    %2039 = vmatpush1.msra.mxu0 0.0
    %2040 = vmatprep.subr.mxu0 0.0
    %2041 = vmatpush1.msra.mxu0 0.0
    %2042 = vmatprep.subr.mxu0 0.0
    %2043 = vmatpush1.msra.mxu0 0.0
    %2044 = vmatprep.subr.mxu0 0.0
    %2045 = vmatpush1.msra.mxu0 0.0
    %2046 = vmatprep.subr.mxu0 0.0
    %2047 = vmatpush1.msra.mxu0 0.0
    %2048 = vmatprep.mubr.f32.mxu0 0.0
    %2049 = vmatmul.mubr.f32.gmra.mrb[0].mxu0 %v1910
    %v2050 = vpop.f32.mrb[0].mxu0
    %v2051 = vadd.f32 0.0, %v2050
    %v2052 = vpop.f32.mrb[0].mxu0
    %v2053 = vadd.f32 0.0, %v2052
    %2054 = vdwg.mxu0
    %v2059 = vcombine.low %v1980, %v1982
    %v2060 = vcombine.low %v2051, %v2053
    %v2062 = vunpack.c.l.s4 1983009808
    %v2063 = vunpack.c.0.s8 %v2062
    %v2064 = vlaneseq
    %v2065 = vshrl.u32 %v2064, 7
    %v2066 = vsub.s32 %v2063, %v2065
    %v2067 = vrot.slane %v2059, %v2066
    %v2069 = vunpack.c.l.s4 1983009808
    %v2070 = vunpack.c.0.s8 %v2069
    %v2071 = vlaneseq
    %v2072 = vshrl.u32 %v2071, 7
    %v2073 = vsub.s32 %v2070, %v2072
    %v2074 = vrot.slane %v2060, %v2073
    %v2075 = vcombine.low %v2067, %v2074
    %v2077 = vadd.f32 %v1912, %v2075
    %v2078 = vxor.u32 %v2077, 2147483648
    %v2079 = vmul.f32 %v2078, 1.442695
    %v2080 = vpow.pop %v2079
    %v2081 = vadd.f32 %v2080, 1.0
    %v2082 = vrcp.pop %v2081
    %v2083 = vmul.f32 1.0, %v2082
    %v2085 = vrot.slane %v2077, 2
    %v2087 = vxor.u32 %v2085, 2147483648
    %v2088 = vmul.f32 %v2087, 1.442695
    %v2089 = vpow.pop %v2088
    %v2090 = vadd.f32 %v2089, 1.0
    %v2091 = vrcp.pop %v2090
    %v2092 = vmul.f32 1.0, %v2091
    %v2093 = vrot.slane %v2077, 4
    %v2095 = vtanh.pop %v2093
    %v2096 = vrot.slane %v2077, 6
    %v2098 = vxor.u32 %v2096, 2147483648
    %v2099 = vmul.f32 %v2098, 1.442695
    %v2100 = vpow.pop %v2099
    %v2101 = vadd.f32 %v2100, 1.0
    %v2102 = vrcp.pop %v2101
    %v2103 = vmul.f32 1.0, %v2102
    %v2104 = vmul.f32 %v2092, %v1908
    %v2105 = vmul.f32 %v2083, %v2095
    %v2106 = vadd.f32 %v2104, %v2105
    %v2107 = vtanh.pop %v2106
    %v2108 = vmul.f32 %v2103, %v2107
    %s2109 = scalar_lea.vmem [#allocation2], 56
    %v2110 = vld [vmem:[%s2109] sm:$0xff]
    %2111 = vmatprep.subr.mxu0 %v662
    %2112 = vmatpush1.msra.mxu0 %v661
    %2113 = vmatprep.subr.mxu0 %v666
    %2114 = vmatpush1.msra.mxu0 %v665
    %2115 = vmatprep.subr.mxu0 %v670
    %2116 = vmatpush1.msra.mxu0 %v669
    %2117 = vmatprep.subr.mxu0 %v674
    %2118 = vmatpush1.msra.mxu0 %v673
    %2119 = vmatprep.subr.mxu0 %v678
    %2120 = vmatpush1.msra.mxu0 %v677
    %2121 = vmatprep.subr.mxu0 %v682
    %2122 = vmatpush1.msra.mxu0 %v681
    %2123 = vmatprep.subr.mxu0 %v686
    %2124 = vmatpush1.msra.mxu0 %v685
    %2125 = vmatprep.subr.mxu0 %v690
    %2126 = vmatpush1.msra.mxu0 %v689
    %2127 = vmatprep.subr.mxu0 %v694
    %2128 = vmatpush1.msra.mxu0 %v693
    %2129 = vmatprep.subr.mxu0 %v698
    %2130 = vmatpush1.msra.mxu0 %v697
    %2131 = vmatprep.subr.mxu0 %v702
    %2132 = vmatpush1.msra.mxu0 %v701
    %2133 = vmatprep.subr.mxu0 %v706
    %2134 = vmatpush1.msra.mxu0 %v705
    %2135 = vmatprep.subr.mxu0 %v710
    %2136 = vmatpush1.msra.mxu0 %v709
    %2137 = vmatprep.subr.mxu0 %v714
    %2138 = vmatpush1.msra.mxu0 %v713
    %2139 = vmatprep.subr.mxu0 %v718
    %2140 = vmatpush1.msra.mxu0 %v717
    %2141 = vmatprep.subr.mxu0 %v722
    %2142 = vmatpush1.msra.mxu0 %v721
    %2143 = vmatprep.subr.mxu0 0.0
    %2144 = vmatpush1.msra.mxu0 0.0
    %2145 = vmatprep.subr.mxu0 0.0
    %2146 = vmatpush1.msra.mxu0 0.0
    %2147 = vmatprep.subr.mxu0 0.0
    %2148 = vmatpush1.msra.mxu0 0.0
    %2149 = vmatprep.subr.mxu0 0.0
    %2150 = vmatpush1.msra.mxu0 0.0
    %2151 = vmatprep.subr.mxu0 0.0
    %2152 = vmatpush1.msra.mxu0 0.0
    %2153 = vmatprep.subr.mxu0 0.0
    %2154 = vmatpush1.msra.mxu0 0.0
    %2155 = vmatprep.subr.mxu0 0.0
    %2156 = vmatpush1.msra.mxu0 0.0
    %2157 = vmatprep.subr.mxu0 0.0
    %2158 = vmatpush1.msra.mxu0 0.0
    %2159 = vmatprep.subr.mxu0 0.0
    %2160 = vmatpush1.msra.mxu0 0.0
    %2161 = vmatprep.subr.mxu0 0.0
    %2162 = vmatpush1.msra.mxu0 0.0
    %2163 = vmatprep.subr.mxu0 0.0
    %2164 = vmatpush1.msra.mxu0 0.0
    %2165 = vmatprep.subr.mxu0 0.0
    %2166 = vmatpush1.msra.mxu0 0.0
    %2167 = vmatprep.subr.mxu0 0.0
    %2168 = vmatpush1.msra.mxu0 0.0
    %2169 = vmatprep.subr.mxu0 0.0
    %2170 = vmatpush1.msra.mxu0 0.0
    %2171 = vmatprep.subr.mxu0 0.0
    %2172 = vmatpush1.msra.mxu0 0.0
    %2173 = vmatprep.subr.mxu0 0.0
    %2174 = vmatpush1.msra.mxu0 0.0
    %2175 = vmatprep.mubr.f32.mxu0 0.0
    %2176 = vmatmul.mubr.f32.gmra.mrb[0].mxu0 %v2108
    %v2177 = vpop.f32.mrb[0].mxu0
    %v2178 = vadd.f32 0.0, %v2177
    %v2179 = vpop.f32.mrb[0].mxu0
    %v2180 = vadd.f32 0.0, %v2179
    %2181 = vdwg.mxu0
    %2182 = vmatprep.subr.mxu0 %v664
    %2183 = vmatpush1.msra.mxu0 %v663
    %2184 = vmatprep.subr.mxu0 %v668
    %2185 = vmatpush1.msra.mxu0 %v667
    %2186 = vmatprep.subr.mxu0 %v672
    %2187 = vmatpush1.msra.mxu0 %v671
    %2188 = vmatprep.subr.mxu0 %v676
    %2189 = vmatpush1.msra.mxu0 %v675
    %2190 = vmatprep.subr.mxu0 %v680
    %2191 = vmatpush1.msra.mxu0 %v679
    %2192 = vmatprep.subr.mxu0 %v684
    %2193 = vmatpush1.msra.mxu0 %v683
    %2194 = vmatprep.subr.mxu0 %v688
    %2195 = vmatpush1.msra.mxu0 %v687
    %2196 = vmatprep.subr.mxu0 %v692
    %2197 = vmatpush1.msra.mxu0 %v691
    %2198 = vmatprep.subr.mxu0 %v696
    %2199 = vmatpush1.msra.mxu0 %v695
    %2200 = vmatprep.subr.mxu0 %v700
    %2201 = vmatpush1.msra.mxu0 %v699
    %2202 = vmatprep.subr.mxu0 %v704
    %2203 = vmatpush1.msra.mxu0 %v703
    %2204 = vmatprep.subr.mxu0 %v708
    %2205 = vmatpush1.msra.mxu0 %v707
    %2206 = vmatprep.subr.mxu0 %v712
    %2207 = vmatpush1.msra.mxu0 %v711
    %2208 = vmatprep.subr.mxu0 %v716
    %2209 = vmatpush1.msra.mxu0 %v715
    %2210 = vmatprep.subr.mxu0 %v720
    %2211 = vmatpush1.msra.mxu0 %v719
    %2212 = vmatprep.subr.mxu0 %v724
    %2213 = vmatpush1.msra.mxu0 %v723
    %2214 = vmatprep.subr.mxu0 0.0
    %2215 = vmatpush1.msra.mxu0 0.0
    %2216 = vmatprep.subr.mxu0 0.0
    %2217 = vmatpush1.msra.mxu0 0.0
    %2218 = vmatprep.subr.mxu0 0.0
    %2219 = vmatpush1.msra.mxu0 0.0
    %2220 = vmatprep.subr.mxu0 0.0
    %2221 = vmatpush1.msra.mxu0 0.0
    %2222 = vmatprep.subr.mxu0 0.0
    %2223 = vmatpush1.msra.mxu0 0.0
    %2224 = vmatprep.subr.mxu0 0.0
    %2225 = vmatpush1.msra.mxu0 0.0
    %2226 = vmatprep.subr.mxu0 0.0
    %2227 = vmatpush1.msra.mxu0 0.0
    %2228 = vmatprep.subr.mxu0 0.0
    %2229 = vmatpush1.msra.mxu0 0.0
    %2230 = vmatprep.subr.mxu0 0.0
    %2231 = vmatpush1.msra.mxu0 0.0
    %2232 = vmatprep.subr.mxu0 0.0
    %2233 = vmatpush1.msra.mxu0 0.0
    %2234 = vmatprep.subr.mxu0 0.0
    %2235 = vmatpush1.msra.mxu0 0.0
    %2236 = vmatprep.subr.mxu0 0.0
    %2237 = vmatpush1.msra.mxu0 0.0
    %2238 = vmatprep.subr.mxu0 0.0
    %2239 = vmatpush1.msra.mxu0 0.0
    %2240 = vmatprep.subr.mxu0 0.0
    %2241 = vmatpush1.msra.mxu0 0.0
    %2242 = vmatprep.subr.mxu0 0.0
    %2243 = vmatpush1.msra.mxu0 0.0
    %2244 = vmatprep.subr.mxu0 0.0
    %2245 = vmatpush1.msra.mxu0 0.0
    %2246 = vmatprep.mubr.f32.mxu0 0.0
    %2247 = vmatmul.mubr.f32.gmra.mrb[0].mxu0 %v2108
    %v2248 = vpop.f32.mrb[0].mxu0
    %v2249 = vadd.f32 0.0, %v2248
    %v2250 = vpop.f32.mrb[0].mxu0
    %v2251 = vadd.f32 0.0, %v2250
    %2252 = vdwg.mxu0
    %v2257 = vcombine.low %v2178, %v2180
    %v2258 = vcombine.low %v2249, %v2251
    %v2260 = vunpack.c.l.s4 1983009808
    %v2261 = vunpack.c.0.s8 %v2260
    %v2262 = vlaneseq
    %v2263 = vshrl.u32 %v2262, 7
    %v2264 = vsub.s32 %v2261, %v2263
    %v2265 = vrot.slane %v2257, %v2264
    %v2267 = vunpack.c.l.s4 1983009808
    %v2268 = vunpack.c.0.s8 %v2267
    %v2269 = vlaneseq
    %v2270 = vshrl.u32 %v2269, 7
    %v2271 = vsub.s32 %v2268, %v2270
    %v2272 = vrot.slane %v2258, %v2271
    %v2273 = vcombine.low %v2265, %v2272
    %v2275 = vadd.f32 %v2110, %v2273
    %v2276 = vxor.u32 %v2275, 2147483648
    %v2277 = vmul.f32 %v2276, 1.442695
    %v2278 = vpow.pop %v2277
    %v2279 = vadd.f32 %v2278, 1.0
    %v2280 = vrcp.pop %v2279
    %v2281 = vmul.f32 1.0, %v2280
    %v2283 = vrot.slane %v2275, 2
    %v2285 = vxor.u32 %v2283, 2147483648
    %v2286 = vmul.f32 %v2285, 1.442695
    %v2287 = vpow.pop %v2286
    %v2288 = vadd.f32 %v2287, 1.0
    %v2289 = vrcp.pop %v2288
    %v2290 = vmul.f32 1.0, %v2289
    %v2291 = vrot.slane %v2275, 4
    %v2293 = vtanh.pop %v2291
    %v2294 = vrot.slane %v2275, 6
    %v2296 = vxor.u32 %v2294, 2147483648
    %v2297 = vmul.f32 %v2296, 1.442695
    %v2298 = vpow.pop %v2297
    %v2299 = vadd.f32 %v2298, 1.0
    %v2300 = vrcp.pop %v2299
    %v2301 = vmul.f32 1.0, %v2300
    %v2302 = vmul.f32 %v2290, %v2106
    %v2303 = vmul.f32 %v2281, %v2293
    %v2304 = vadd.f32 %v2302, %v2303
    %v2305 = vtanh.pop %v2304
    %v2306 = vmul.f32 %v2301, %v2305
    %v2307 = vmax.f32 %v2306, 0.0
    %v2308 = vld [vmem:[#allocation6] sm:$0xff]
    %v2309 = vld [vmem:[#allocation6 + $0x8] sm:$0xff]
    %v2310 = vld [vmem:[#allocation6 + $0x10] sm:$0xff]
    %v2311 = vld [vmem:[#allocation6 + $0x18] sm:$0xff]
    %v2312 = vld [vmem:[#allocation6 + $0x20] sm:$0xff]
    %v2313 = vld [vmem:[#allocation6 + $0x28] sm:$0xff]
    %v2314 = vld [vmem:[#allocation6 + $0x30] sm:$0xff]
    %v2315 = vld [vmem:[#allocation6 + $0x38] sm:$0xff]
    %v2316 = vld [vmem:[#allocation6 + $0x40] sm:$0xff]
    %v2317 = vld [vmem:[#allocation6 + $0x48] sm:$0xff]
    %v2318 = vld [vmem:[#allocation6 + $0x50] sm:$0xff]
    %v2319 = vld [vmem:[#allocation6 + $0x58] sm:$0xff]
    %v2320 = vld [vmem:[#allocation6 + $0x60] sm:$0xff]
    %v2321 = vld [vmem:[#allocation6 + $0x68] sm:$0xff]
    %v2322 = vld [vmem:[#allocation6 + $0x70] sm:$0xff]
    %v2323 = vld [vmem:[#allocation6 + $0x78] sm:$0xff]
    %v2324 = vld [vmem:[%s9] sm:$0x1]
    %v2326 = vlaneseq
    %v2327 = vshrl.u32 %v2326, 7
    %v2328 = vsub.s32 0, %v2327
    %v2329 = vrot.slane %v2324, %v2328
    %2331 = vmatprep.subr.mxu0 0.0
    %2332 = vmatpush1.msra.mxu0 %v2308
    %2333 = vmatprep.subr.mxu0 0.0
    %2334 = vmatpush1.msra.mxu0 %v2309
    %2335 = vmatprep.subr.mxu0 0.0
    %2336 = vmatpush1.msra.mxu0 %v2310
    %2337 = vmatprep.subr.mxu0 0.0
    %2338 = vmatpush1.msra.mxu0 %v2311
    %2339 = vmatprep.subr.mxu0 0.0
    %2340 = vmatpush1.msra.mxu0 %v2312
    %2341 = vmatprep.subr.mxu0 0.0
    %2342 = vmatpush1.msra.mxu0 %v2313
    %2343 = vmatprep.subr.mxu0 0.0
    %2344 = vmatpush1.msra.mxu0 %v2314
    %2345 = vmatprep.subr.mxu0 0.0
    %2346 = vmatpush1.msra.mxu0 %v2315
    %2347 = vmatprep.subr.mxu0 0.0
    %2348 = vmatpush1.msra.mxu0 %v2316
    %2349 = vmatprep.subr.mxu0 0.0
    %2350 = vmatpush1.msra.mxu0 %v2317
    %2351 = vmatprep.subr.mxu0 0.0
    %2352 = vmatpush1.msra.mxu0 %v2318
    %2353 = vmatprep.subr.mxu0 0.0
    %2354 = vmatpush1.msra.mxu0 %v2319
    %2355 = vmatprep.subr.mxu0 0.0
    %2356 = vmatpush1.msra.mxu0 %v2320
    %2357 = vmatprep.subr.mxu0 0.0
    %2358 = vmatpush1.msra.mxu0 %v2321
    %2359 = vmatprep.subr.mxu0 0.0
    %2360 = vmatpush1.msra.mxu0 %v2322
    %2361 = vmatprep.subr.mxu0 0.0
    %2362 = vmatpush1.msra.mxu0 %v2323
    %2363 = vmatprep.subr.mxu0 0.0
    %2364 = vmatpush1.msra.mxu0 0.0
    %2365 = vmatprep.subr.mxu0 0.0
    %2366 = vmatpush1.msra.mxu0 0.0
    %2367 = vmatprep.subr.mxu0 0.0
    %2368 = vmatpush1.msra.mxu0 0.0
    %2369 = vmatprep.subr.mxu0 0.0
    %2370 = vmatpush1.msra.mxu0 0.0
    %2371 = vmatprep.subr.mxu0 0.0
    %2372 = vmatpush1.msra.mxu0 0.0
    %2373 = vmatprep.subr.mxu0 0.0
    %2374 = vmatpush1.msra.mxu0 0.0
    %2375 = vmatprep.subr.mxu0 0.0
    %2376 = vmatpush1.msra.mxu0 0.0
    %2377 = vmatprep.subr.mxu0 0.0
    %2378 = vmatpush1.msra.mxu0 0.0
    %2379 = vmatprep.subr.mxu0 0.0
    %2380 = vmatpush1.msra.mxu0 0.0
    %2381 = vmatprep.subr.mxu0 0.0
    %2382 = vmatpush1.msra.mxu0 0.0
    %2383 = vmatprep.subr.mxu0 0.0
    %2384 = vmatpush1.msra.mxu0 0.0
    %2385 = vmatprep.subr.mxu0 0.0
    %2386 = vmatpush1.msra.mxu0 0.0
    %2387 = vmatprep.subr.mxu0 0.0
    %2388 = vmatpush1.msra.mxu0 0.0
    %2389 = vmatprep.subr.mxu0 0.0
    %2390 = vmatpush1.msra.mxu0 0.0
    %2391 = vmatprep.subr.mxu0 0.0
    %2392 = vmatpush1.msra.mxu0 0.0
    %2393 = vmatprep.subr.mxu0 0.0
    %2394 = vmatpush1.msra.mxu0 0.0
    %2395 = vmatprep.mubr.f32.mxu0 0.0
    %2396 = vmatmul.mubr.f32.gmra.mrb[0].mxu0 %v2307
    %v2397 = vpop.f32.mrb[0].mxu0
    %v2398 = vadd.f32 %v2329, %v2397
    %v2399 = vpop.f32.mrb[0].mxu0
    %2400 = vdwg.mxu0
    %v2401 = vtanh.pop %v2398
    %2402 = vst [vmem:[#allocation8] sm:$0x3] %v2401
    %2403 = vst [vmem:[#allocation9] sm:$0x3] %v2306
    %2404 = vst [vmem:[#allocation11] sm:$0x3] %v2304
    // Predicated region
    $region50: #{tpu_custom_call.1} parent=1 // pred_check
      _
    $region51: #{tpu_custom_call.1} parent=1 // pred_check_branch
      %2406 = sbr.rel (0) target = $region53
    $region52: #{tpu_custom_call.1} parent=1 // pred_region
      %s2408 = ssub.s32 32, 32
      %2409 = vsyncadd [#allocation5], %s2408
      %s2411 = sshll.u32 [#allocation8], 4
      %s2412 = int_to_ptr.vmem [resolvable:$true] %s2411
      %2414 = dma.vmem_to_hbm [thread:$0]  %s2412, 32, %s10, [#allocation5]
    $region53: #{tpu_custom_call.1} parent=1 // pred_fallthru
      _
    // Predicated region
    $region54: #{tpu_custom_call.1} parent=1 // pred_check
      _
    $region55: #{tpu_custom_call.1} parent=1 // pred_check_branch
      %2416 = sbr.rel (0) target = $region57
    $region56: #{tpu_custom_call.1} parent=1 // pred_region
      %s2418 = ssub.s32 32, 32
      %2419 = vsyncadd [#allocation10], %s2418
      %s2421 = sshll.u32 [#allocation9], 4
      %s2422 = int_to_ptr.vmem [resolvable:$true] %s2421
      %2424 = dma.vmem_to_hbm [thread:$0]  %s2422, 32, %s11, [#allocation10]
    $region57: #{tpu_custom_call.1} parent=1 // pred_fallthru
      _
    // Predicated region
    $region58: #{tpu_custom_call.1} parent=1 // pred_check
      _
    $region59: #{tpu_custom_call.1} parent=1 // pred_check_branch
      %2426 = sbr.rel (0) target = $region61
    $region60: #{tpu_custom_call.1} parent=1 // pred_region
      %s2428 = ssub.s32 32, 32
      %2429 = vsyncadd [#allocation10], %s2428
      %s2431 = sshll.u32 [#allocation11], 4
      %s2432 = int_to_ptr.vmem [resolvable:$true] %s2431
      %2434 = dma.vmem_to_hbm [thread:$0]  %s2432, 32, %s12, [#allocation10]
    $region61: #{tpu_custom_call.1} parent=1 // pred_fallthru
      _
    // Predicated region
    $region62: #{tpu_custom_call.1} parent=1 // pred_check
      _
    $region63: #{tpu_custom_call.1} parent=1 // pred_check_branch
      %2436 = sbr.rel (0) target = $region65
    $region64: #{tpu_custom_call.1} parent=1 // pred_region
      %2437 = dma.done [#allocation5], 32
    $region65: #{tpu_custom_call.1} parent=1 // pred_fallthru
      _
    // Predicated region
    $region66: #{tpu_custom_call.1} parent=1 // pred_check
      _
    $region67: #{tpu_custom_call.1} parent=1 // pred_check_branch
      %2439 = sbr.rel (0) target = $region69
    $region68: #{tpu_custom_call.1} parent=1 // pred_region
      %2440 = dma.done [#allocation10], 32
    $region69: #{tpu_custom_call.1} parent=1 // pred_fallthru
      _
    // Predicated region
    $region70: #{tpu_custom_call.1} parent=1 // pred_check
      _
    $region71: #{tpu_custom_call.1} parent=1 // pred_check_branch
      %2442 = sbr.rel (0) target = $region73
    $region72: #{tpu_custom_call.1} parent=1 // pred_region
      %2443 = dma.done [#allocation10], 32
    $region73: #{tpu_custom_call.1} parent=1 // pred_fallthru
      _
    %2444 = vsyncpa [#allocation4], 1
    %2445 = vsyncpa [#allocation7], 1
    %2446 = vsyncpa [#allocation5], 1
    %2447 = vsyncpa [#allocation10], 1

</llo_original>
